<compile_context>
chip_gen: v6e
topology: v6e:2x2x1
jax: 0.10.0
libtpu: 0.0.40
codegen_flags: <defaults>
</compile_context>

<pallas_src>
import random

import jax
import jax.numpy as jnp
from jax.experimental import pallas as pl
from jax.experimental.pallas import tpu as pltpu


# ----------------------------------------------------------------------------
# Encoder kernel: GRU over the full source sequence, single invocation.
# ----------------------------------------------------------------------------
def _encoder_kernel(x_ref, wih_ref, whh_ref, bih_ref, bhh_ref,
                    enc_out_ref, h_final_ref, gi_scr):
    S, B, E_in = x_ref.shape
    H = whh_ref.shape[0]

    # Hoisted input projection: one MXU matmul covering every timestep.
    x_flat = x_ref[...].reshape(S * B, E_in)
    gi_all = jnp.dot(x_flat, wih_ref[...],
                     preferred_element_type=jnp.float32) + bih_ref[...]
    gi_scr[...] = gi_all.reshape(S, B, 3 * H)

    whh = whh_ref[...]
    bhh = bhh_ref[...]

    def step(t, h):
        gi = gi_scr[t]                                                # (B, 3H)
        gh = jnp.dot(h, whh, preferred_element_type=jnp.float32) + bhh
        r = jax.nn.sigmoid(gi[:, 0 * H:1 * H] + gh[:, 0 * H:1 * H])
        z = jax.nn.sigmoid(gi[:, 1 * H:2 * H] + gh[:, 1 * H:2 * H])
        n = jnp.tanh(gi[:, 2 * H:3 * H] + r * gh[:, 2 * H:3 * H])
        h_new = (1.0 - z) * n + z * h
        enc_out_ref[t] = h_new.astype(enc_out_ref.dtype)
        return h_new

    h0 = jnp.zeros((B, H), jnp.float32)
    h_last = jax.lax.fori_loop(0, S, step, h0, unroll=True)
    h_final_ref[...] = h_last.astype(h_final_ref.dtype)


def encoder_forward(x_emb, wih, whh, bih, bhh):
    """x_emb: (S, B, E_in) f32 -> (enc_out (S, B, H), h_final (B, H))."""
    S, B, E_in = x_emb.shape
    H = whh.shape[0]
    return pl.pallas_call(
        _encoder_kernel,
        out_shape=(jax.ShapeDtypeStruct((S, B, H), jnp.float32),
                   jax.ShapeDtypeStruct((B, H), jnp.float32)),
        scratch_shapes=[pltpu.VMEM((S, B, 3 * H), jnp.float32)],
    )(x_emb, wih, whh, bih, bhh)


# ----------------------------------------------------------------------------
# Fused decoder kernel: the entire decode loop in one pallas_call.
# grid = (tgt_len - 1,), "arbitrary" (recurrent). State in VMEM scratch.
# ----------------------------------------------------------------------------
def _decoder_kernel(tf_ref,                                   # SMEM (scalar prefetch)
                    enc_ref, h0_ref, tgt_oh_ref, emb_ref,
                    wa_h_ref, wa_e_ref, va_ref,
                    wih_e_ref, wih_c_ref, whh_ref, bih_ref, bhh_ref,
                    wo_h_ref, wo_c_ref, wo_e_ref, bout_ref,
                    logits_ref,                               # out block (1, B, V)
                    h_scr, onehot_scr, encproj_scr):
    i = pl.program_id(0)
    S, B, H = enc_ref.shape
    Ha = wa_h_ref.shape[1]
    V = wo_h_ref.shape[1]

    @pl.when(i == 0)
    def _init():
        h_scr[...] = h0_ref[...]
        onehot_scr[...] = tgt_oh_ref[0]
        # Encoder-side attention projection is step-invariant: compute once.
        enc_flat = enc_ref[...].reshape(S * B, H)
        proj = jnp.dot(enc_flat, wa_e_ref[...],
                       preferred_element_type=jnp.float32)
        encproj_scr[...] = proj.reshape(S, B, Ha)

    h = h_scr[...]                     # (B, H)
    onehot = onehot_scr[...]           # (B, V) one-hot of the input token
    enc = enc_ref[...]                 # (S, B, H)

    # Embedding lookup as a one-hot matmul (no gather, rides the MXU).
    emb = jnp.dot(onehot, emb_ref[...], preferred_element_type=jnp.float32)   # (B, E)

    # --- additive attention (time-major, split weights, no concats) ---
    h_proj = jnp.dot(h, wa_h_ref[...], preferred_element_type=jnp.float32)    # (B, Ha)
    energy = jnp.tanh(encproj_scr[...] + h_proj[None, :, :])                  # (S, B, Ha)
    scores = jnp.sum(energy * va_ref[...][None, :, :],
                     axis=-1, keepdims=True)                                  # (S, B, 1)
    scores = scores - jnp.max(scores, axis=0, keepdims=True)
    e = jnp.exp(scores)
    attn = e * pl.reciprocal(jnp.sum(e, axis=0, keepdims=True), approx=False)  # (S, B, 1)
    context = jnp.sum(attn * enc, axis=0)                                      # (B, H)

    # --- GRU cell on (emb, context) with pre-split input weights ---
    gi = (jnp.dot(emb, wih_e_ref[...], preferred_element_type=jnp.float32)
          + jnp.dot(context, wih_c_ref[...], preferred_element_type=jnp.float32)
          + bih_ref[...])
    gh = jnp.dot(h, whh_ref[...], preferred_element_type=jnp.float32) + bhh_ref[...]
    r = jax.nn.sigmoid(gi[:, 0 * H:1 * H] + gh[:, 0 * H:1 * H])
    z = jax.nn.sigmoid(gi[:, 1 * H:2 * H] + gh[:, 1 * H:2 * H])
    n = jnp.tanh(gi[:, 2 * H:3 * H] + r * gh[:, 2 * H:3 * H])
    h_new = (1.0 - z) * n + z * h

    # --- output projection over [h_new; context; emb] via split weights ---
    logits = (jnp.dot(h_new, wo_h_ref[...], preferred_element_type=jnp.float32)
              + jnp.dot(context, wo_c_ref[...], preferred_element_type=jnp.float32)
              + jnp.dot(emb, wo_e_ref[...], preferred_element_type=jnp.float32)
              + bout_ref[...])
    logits_ref[0] = logits.astype(logits_ref.dtype)

    # --- next input token: greedy argmax (first max) vs teacher forcing ---
    m = jnp.max(logits, axis=1, keepdims=True)                                # (B, 1)
    idx = jax.lax.broadcasted_iota(jnp.int32, (B, V), 1).astype(jnp.float32)  # (B, V)
    first = jnp.min(jnp.where(logits == m, idx, jnp.float32(V)),
                    axis=1, keepdims=True)                                    # (B, 1)
    pred_onehot = (idx == first).astype(jnp.float32)                          # (B, V)

    teacher_onehot = tgt_oh_ref[i + 1]                                        # (B, V)
    tf = (tf_ref[i] > 0).astype(jnp.float32)                                  # scalar
    onehot_scr[...] = tf * teacher_onehot + (1.0 - tf) * pred_onehot
    h_scr[...] = h_new


def decoder_forward(enc_sbh, h0, tgt_onehot, tf_flags, p):
    S, B, H = enc_sbh.shape
    T = tgt_onehot.shape[0]
    V = p['out_wh'].shape[1]
    Ha = p['attn_wh'].shape[1]
    E_dec = p['dec_emb'].shape[1]
    n_steps = T - 1

    def _full(shape):
        nd = len(shape)
        return pl.BlockSpec(shape, lambda i, tf, _nd=nd: (0,) * _nd)

    inputs = (enc_sbh, h0, tgt_onehot, p['dec_emb'],
              p['attn_wh'], p['attn_we'], p['attn_v'],
              p['dec_wih_e'], p['dec_wih_c'], p['dec_whh'],
              p['dec_bih'], p['dec_bhh'],
              p['out_wh'], p['out_wc'], p['out_we'], p['out_b'])

    grid_spec = pltpu.PrefetchScalarGridSpec(
        num_scalar_prefetch=1,
        grid=(n_steps,),
        in_specs=[_full(x.shape) for x in inputs],
        out_specs=pl.BlockSpec((1, B, V), lambda i, tf: (i, 0, 0)),
        scratch_shapes=[pltpu.VMEM((B, H), jnp.float32),     # hidden state
                        pltpu.VMEM((B, V), jnp.float32),     # fed-back token (one-hot)
                        pltpu.VMEM((S, B, Ha), jnp.float32)])  # enc attention proj

    flops_per_step = 2 * B * (V * E_dec + H * Ha + S * Ha
                              + (E_dec + 2 * H) * 3 * H + (2 * H + E_dec) * V)
    cost = pl.CostEstimate(
        flops=n_steps * flops_per_step + 2 * S * B * H * Ha,
        transcendentals=n_steps * (S * B * Ha + 3 * B * H + 2 * S * B),
        bytes_accessed=4 * (S * B * H + B * H + T * B * V + V * E_dec
                            + 2 * H * Ha + Ha + (E_dec + 2 * H) * 3 * H
                            + 2 * 3 * H + (2 * H + E_dec) * V + V
                            + n_steps * B * V))

    return pl.pallas_call(
        _decoder_kernel,
        out_shape=jax.ShapeDtypeStruct((n_steps, B, V), jnp.float32),
        grid_spec=grid_spec,
        compiler_params=pltpu.CompilerParams(
            dimension_semantics=("arbitrary",)),
        cost_estimate=cost,
    )(tf_flags, *inputs)


# ----------------------------------------------------------------------------
# Parameters (deterministic, synthetic). Attention / GRU-input / output
# projection weights are stored pre-split (mathematically identical to the
# concatenated form).
# ----------------------------------------------------------------------------
def init_params(key, *, word_vocab, char_vocab, tgt_vocab,
                e_word, e_char, e_dec, hidden, attn_dim):
    ks = jax.random.split(key, 20)
    s = 0.1
    e_in = e_word + e_char
    H = hidden
    return {
        'enc_word_emb': s * jax.random.normal(ks[0], (word_vocab, e_word), jnp.float32),
        'enc_char_emb': s * jax.random.normal(ks[1], (char_vocab, e_char), jnp.float32),
        'enc_wih': s * jax.random.normal(ks[2], (e_in, 3 * H), jnp.float32),
        'enc_whh': s * jax.random.normal(ks[3], (H, 3 * H), jnp.float32),
        'enc_bih': s * jax.random.normal(ks[4], (1, 3 * H), jnp.float32),
        'enc_bhh': s * jax.random.normal(ks[5], (1, 3 * H), jnp.float32),
        'dec_emb': s * jax.random.normal(ks[6], (tgt_vocab, e_dec), jnp.float32),
        'attn_wh': s * jax.random.normal(ks[7], (H, attn_dim), jnp.float32),
        'attn_we': s * jax.random.normal(ks[8], (H, attn_dim), jnp.float32),
        'attn_v': s * jax.random.normal(ks[9], (1, attn_dim), jnp.float32),
        'dec_wih_e': s * jax.random.normal(ks[10], (e_dec, 3 * H), jnp.float32),
        'dec_wih_c': s * jax.random.normal(ks[11], (H, 3 * H), jnp.float32),
        'dec_whh': s * jax.random.normal(ks[12], (H, 3 * H), jnp.float32),
        'dec_bih': s * jax.random.normal(ks[13], (1, 3 * H), jnp.float32),
        'dec_bhh': s * jax.random.normal(ks[14], (1, 3 * H), jnp.float32),
        'out_wh': s * jax.random.normal(ks[15], (H, tgt_vocab), jnp.float32),
        'out_wc': s * jax.random.normal(ks[16], (H, tgt_vocab), jnp.float32),
        'out_we': s * jax.random.normal(ks[17], (e_dec, tgt_vocab), jnp.float32),
        'out_b': s * jax.random.normal(ks[18], (1, tgt_vocab), jnp.float32),
    }


# ----------------------------------------------------------------------------
# Seq2Seq forward (mirrors the PyTorch module's forward)
# ----------------------------------------------------------------------------
def seq2seq_forward(params, src_w, tgt_w, src_c, tgt_c,
                    lengths=None, teacher_forcing_ratio=0.5, rng_seed=0):
    """src_w/tgt_w: (len, B) int32; src_c/tgt_c: (len, B, n_chars) int32.
    Returns outputs: (tgt_len, B, tgt_vocab) float32 with outputs[0] == 0."""
    del tgt_c, lengths   # lengths=None path of the reference (no attention mask)
    random.seed(rng_seed)  # deterministic teacher-forcing draws, like the module

    batch_size = src_w.shape[1]
    max_len = tgt_w.shape[0]
    tgt_vocab = params['out_wh'].shape[1]

    # Encoder embeddings (gathers stay in plain-JAX glue).
    w_emb = jnp.take(params['enc_word_emb'], src_w, axis=0)        # (S, B, Ew)
    c_emb = jnp.take(params['enc_char_emb'], src_c, axis=0)        # (S, B, n_chars, Ec)
    c_emb = jnp.mean(c_emb, axis=2)                                # (S, B, Ec)
    x_emb = jnp.concatenate([w_emb, c_emb], axis=-1)               # (S, B, Ew+Ec)

    enc_sbh, hidden = encoder_forward(
        x_emb, params['enc_wih'], params['enc_whh'],
        params['enc_bih'], params['enc_bhh'])

    # Teacher-forcing decisions drawn exactly like the reference (one host
    # random.random() per decode step), precomputed so the fused decoder never
    # syncs back to the host.
    tf_flags = jnp.asarray(
        [1 if random.random() < teacher_forcing_ratio else 0
         for _ in range(1, max_len)], dtype=jnp.int32)             # (T-1,)

    tgt_onehot = jax.nn.one_hot(tgt_w, tgt_vocab, dtype=jnp.float32)  # (T, B, V)

    logits_seq = decoder_forward(enc_sbh, hidden, tgt_onehot, tf_flags, params)
    outputs0 = jnp.zeros((1, batch_size, tgt_vocab), jnp.float32)
    return jnp.concatenate([outputs0, logits_seq], axis=0)


# ----------------------------------------------------------------------------
if __name__ == "__main__":
    # Small but lane/sublane-dense shapes.
    SRC_LEN, TGT_LEN, B = 8, 8, 8
    WORD_VOCAB, CHAR_VOCAB, TGT_VOCAB = 64, 32, 128
    E_WORD, E_CHAR, E_DEC = 96, 32, 128        # E_WORD + E_CHAR = 128
    HIDDEN, ATTN_DIM = 128, 128
    N_CHARS = 6

    key = jax.random.PRNGKey(0)
    k_par, k_sw, k_tw, k_sc, k_tc = jax.random.split(key, 5)

    params = init_params(k_par, word_vocab=WORD_VOCAB, char_vocab=CHAR_VOCAB,
                         tgt_vocab=TGT_VOCAB, e_word=E_WORD, e_char=E_CHAR,
                         e_dec=E_DEC, hidden=HIDDEN, attn_dim=ATTN_DIM)

    src_w = jax.random.randint(k_sw, (SRC_LEN, B), 0, WORD_VOCAB, jnp.int32)
    tgt_w = jax.random.randint(k_tw, (TGT_LEN, B), 0, TGT_VOCAB, jnp.int32)
    src_c = jax.random.randint(k_sc, (SRC_LEN, B, N_CHARS), 0, CHAR_VOCAB, jnp.int32)
    tgt_c = jax.random.randint(k_tc, (TGT_LEN, B, N_CHARS), 0, CHAR_VOCAB, jnp.int32)

    outputs = seq2seq_forward(params, src_w, tgt_w, src_c, tgt_c,
                              teacher_forcing_ratio=0.5, rng_seed=0)
    outputs = jax.block_until_ready(outputs)
    assert outputs.shape == (TGT_LEN, B, TGT_VOCAB)
    assert bool(jnp.all(outputs[0] == 0.0))
    assert bool(jnp.all(jnp.isfinite(outputs)))
    print("KERNEL_OK")
</pallas_src>

<mosaic_0001>
module attributes {stable_mosaic.version = 11 : i64} {
  func.func @_encoder_kernel(%arg0: memref<8x8x128xf32, #tpu.memory_space<vmem>>, %arg1: memref<128x384xf32, #tpu.memory_space<vmem>>, %arg2: memref<128x384xf32, #tpu.memory_space<vmem>>, %arg3: memref<1x384xf32, #tpu.memory_space<vmem>>, %arg4: memref<1x384xf32, #tpu.memory_space<vmem>>, %arg5: memref<8x8x128xf32, #tpu.memory_space<vmem>>, %arg6: memref<8x128xf32, #tpu.memory_space<vmem>>, %arg7: memref<8x8x384xf32, #tpu.memory_space<vmem>>) attributes {dimension_semantics = [], scalar_prefetch = 0 : i64, scratch_operands = 1 : i64, tpu.core_type = #tpu.core_type<tc>} {
    %c0 = arith.constant 0 : index
    %c0_0 = arith.constant 0 : index
    %c0_1 = arith.constant 0 : index
    %0 = vector.load %arg0[%c0, %c0_0, %c0_1] : memref<8x8x128xf32, #tpu.memory_space<vmem>>, vector<8x8x128xf32>
    %1 = vector.shape_cast %0 : vector<8x8x128xf32> to vector<64x128xf32>
    %c0_2 = arith.constant 0 : index
    %c0_3 = arith.constant 0 : index
    %2 = vector.load %arg1[%c0_2, %c0_3] : memref<128x384xf32, #tpu.memory_space<vmem>>, vector<128x384xf32>
    %cst = arith.constant dense<0.000000e+00> : vector<64x384xf32>
    %3 = tpu.matmul %1, %2, %cst {dimension_numbers = #tpu.dot_dimension_numbers<[1], [0], [0], [1], [0, 0, 1, 1], [], []>} : vector<64x128xf32>, vector<128x384xf32>, vector<64x384xf32> -> vector<64x384xf32>
    %c0_4 = arith.constant 0 : index
    %c0_5 = arith.constant 0 : index
    %4 = vector.load %arg3[%c0_4, %c0_5] : memref<1x384xf32, #tpu.memory_space<vmem>>, vector<1x384xf32>
    %5 = vector.broadcast %4 : vector<1x384xf32> to vector<64x384xf32>
    %6 = arith.addf %3, %5 : vector<64x384xf32>
    %7 = vector.shape_cast %6 : vector<64x384xf32> to vector<8x8x384xf32>
    %c0_6 = arith.constant 0 : index
    %c0_7 = arith.constant 0 : index
    %c0_8 = arith.constant 0 : index
    %8 = vector.load %arg7[%c0_6, %c0_7, %c0_8] : memref<8x8x384xf32, #tpu.memory_space<vmem>>, vector<8x8x384xf32>
    tpu.vector_store %arg7[%c0_6, %c0_7, %c0_8], %7 {strides = array<i32>} : memref<8x8x384xf32, #tpu.memory_space<vmem>>, vector<8x8x384xf32>,
    %c0_9 = arith.constant 0 : index
    %c0_10 = arith.constant 0 : index
    %9 = vector.load %arg2[%c0_9, %c0_10] : memref<128x384xf32, #tpu.memory_space<vmem>>, vector<128x384xf32>
    %c0_11 = arith.constant 0 : index
    %c0_12 = arith.constant 0 : index
    %10 = vector.load %arg4[%c0_11, %c0_12] : memref<1x384xf32, #tpu.memory_space<vmem>>, vector<1x384xf32>
    %cst_13 = arith.constant 0.000000e+00 : f32
    %11 = vector.broadcast %cst_13 : f32 to vector<8x128xf32>
    %c0_i32 = arith.constant 0 : i32
    %12 = arith.index_cast %c0_i32 : i32 to index
    %c0_14 = arith.constant 0 : index
    %c0_15 = arith.constant 0 : index
    %13 = vector.load %arg7[%12, %c0_14, %c0_15] : memref<8x8x384xf32, #tpu.memory_space<vmem>>, vector<1x8x384xf32>
    %14 = vector.shape_cast %13 : vector<1x8x384xf32> to vector<8x384xf32>
    %cst_16 = arith.constant dense<0.000000e+00> : vector<8x384xf32>
    %15 = tpu.matmul %11, %9, %cst_16 {dimension_numbers = #tpu.dot_dimension_numbers<[1], [0], [0], [1], [0, 0, 1, 1], [], []>} : vector<8x128xf32>, vector<128x384xf32>, vector<8x384xf32> -> vector<8x384xf32>
    %16 = vector.broadcast %10 : vector<1x384xf32> to vector<8x384xf32>
    %17 = arith.addf %15, %16 : vector<8x384xf32>
    %18 = vector.extract_strided_slice %14 {offsets = [0, 0], sizes = [8, 128], strides = [1, 1]} : vector<8x384xf32> to vector<8x128xf32>
    %19 = vector.extract_strided_slice %17 {offsets = [0, 0], sizes = [8, 128], strides = [1, 1]} : vector<8x384xf32> to vector<8x128xf32>
    %20 = arith.addf %18, %19 : vector<8x128xf32>
    %21 = arith.negf %20 : vector<8x128xf32>
    %22 = math.exp %21 : vector<8x128xf32>
    %cst_17 = arith.constant 1.000000e+00 : f32
    %23 = vector.broadcast %cst_17 : f32 to vector<8x128xf32>
    %24 = arith.addf %23, %22 : vector<8x128xf32>
    %25 = arith.divf %23, %24 : vector<8x128xf32>
    %26 = vector.extract_strided_slice %14 {offsets = [0, 128], sizes = [8, 128], strides = [1, 1]} : vector<8x384xf32> to vector<8x128xf32>
    %27 = vector.extract_strided_slice %17 {offsets = [0, 128], sizes = [8, 128], strides = [1, 1]} : vector<8x384xf32> to vector<8x128xf32>
    %28 = arith.addf %26, %27 : vector<8x128xf32>
    %29 = arith.negf %28 : vector<8x128xf32>
    %30 = math.exp %29 : vector<8x128xf32>
    %cst_18 = arith.constant 1.000000e+00 : f32
    %31 = vector.broadcast %cst_18 : f32 to vector<8x128xf32>
    %32 = arith.addf %31, %30 : vector<8x128xf32>
    %33 = arith.divf %31, %32 : vector<8x128xf32>
    %34 = vector.extract_strided_slice %14 {offsets = [0, 256], sizes = [8, 128], strides = [1, 1]} : vector<8x384xf32> to vector<8x128xf32>
    %35 = vector.extract_strided_slice %17 {offsets = [0, 256], sizes = [8, 128], strides = [1, 1]} : vector<8x384xf32> to vector<8x128xf32>
    %36 = arith.mulf %25, %35 : vector<8x128xf32>
    %37 = arith.addf %34, %36 : vector<8x128xf32>
    %38 = math.tanh %37 : vector<8x128xf32>
    %cst_19 = arith.constant 1.000000e+00 : f32
    %39 = vector.broadcast %cst_19 : f32 to vector<8x128xf32>
    %40 = arith.subf %39, %33 : vector<8x128xf32>
    %41 = arith.mulf %40, %38 : vector<8x128xf32>
    %42 = arith.mulf %33, %11 : vector<8x128xf32>
    %43 = arith.addf %41, %42 : vector<8x128xf32>
    %44 = arith.index_cast %c0_i32 : i32 to index
    %c0_20 = arith.constant 0 : index
    %c0_21 = arith.constant 0 : index
    %45 = vector.load %arg5[%44, %c0_20, %c0_21] : memref<8x8x128xf32, #tpu.memory_space<vmem>>, vector<1x8x128xf32>
    %46 = vector.shape_cast %45 : vector<1x8x128xf32> to vector<8x128xf32>
    %47 = vector.shape_cast %43 : vector<8x128xf32> to vector<1x8x128xf32>
    tpu.vector_store %arg5[%44, %c0_20, %c0_21], %47 {strides = array<i32>} : memref<8x8x128xf32, #tpu.memory_space<vmem>>, vector<1x8x128xf32>,
    %c1_i32 = arith.constant 1 : i32
    %48 = arith.index_cast %c1_i32 : i32 to index
    %c0_22 = arith.constant 0 : index
    %c0_23 = arith.constant 0 : index
    %49 = vector.load %arg7[%48, %c0_22, %c0_23] : memref<8x8x384xf32, #tpu.memory_space<vmem>>, vector<1x8x384xf32>
    %50 = vector.shape_cast %49 : vector<1x8x384xf32> to vector<8x384xf32>
    %cst_24 = arith.constant dense<0.000000e+00> : vector<8x384xf32>
    %51 = tpu.matmul %43, %9, %cst_24 {dimension_numbers = #tpu.dot_dimension_numbers<[1], [0], [0], [1], [0, 0, 1, 1], [], []>} : vector<8x128xf32>, vector<128x384xf32>, vector<8x384xf32> -> vector<8x384xf32>
    %52 = vector.broadcast %10 : vector<1x384xf32> to vector<8x384xf32>
    %53 = arith.addf %51, %52 : vector<8x384xf32>
    %54 = vector.extract_strided_slice %50 {offsets = [0, 0], sizes = [8, 128], strides = [1, 1]} : vector<8x384xf32> to vector<8x128xf32>
    %55 = vector.extract_strided_slice %53 {offsets = [0, 0], sizes = [8, 128], strides = [1, 1]} : vector<8x384xf32> to vector<8x128xf32>
    %56 = arith.addf %54, %55 : vector<8x128xf32>
    %57 = arith.negf %56 : vector<8x128xf32>
    %58 = math.exp %57 : vector<8x128xf32>
    %cst_25 = arith.constant 1.000000e+00 : f32
    %59 = vector.broadcast %cst_25 : f32 to vector<8x128xf32>
    %60 = arith.addf %59, %58 : vector<8x128xf32>
    %61 = arith.divf %59, %60 : vector<8x128xf32>
    %62 = vector.extract_strided_slice %50 {offsets = [0, 128], sizes = [8, 128], strides = [1, 1]} : vector<8x384xf32> to vector<8x128xf32>
    %63 = vector.extract_strided_slice %53 {offsets = [0, 128], sizes = [8, 128], strides = [1, 1]} : vector<8x384xf32> to vector<8x128xf32>
    %64 = arith.addf %62, %63 : vector<8x128xf32>
    %65 = arith.negf %64 : vector<8x128xf32>
    %66 = math.exp %65 : vector<8x128xf32>
    %cst_26 = arith.constant 1.000000e+00 : f32
    %67 = vector.broadcast %cst_26 : f32 to vector<8x128xf32>
    %68 = arith.addf %67, %66 : vector<8x128xf32>
    %69 = arith.divf %67, %68 : vector<8x128xf32>
    %70 = vector.extract_strided_slice %50 {offsets = [0, 256], sizes = [8, 128], strides = [1, 1]} : vector<8x384xf32> to vector<8x128xf32>
    %71 = vector.extract_strided_slice %53 {offsets = [0, 256], sizes = [8, 128], strides = [1, 1]} : vector<8x384xf32> to vector<8x128xf32>
    %72 = arith.mulf %61, %71 : vector<8x128xf32>
    %73 = arith.addf %70, %72 : vector<8x128xf32>
    %74 = math.tanh %73 : vector<8x128xf32>
    %cst_27 = arith.constant 1.000000e+00 : f32
    %75 = vector.broadcast %cst_27 : f32 to vector<8x128xf32>
    %76 = arith.subf %75, %69 : vector<8x128xf32>
    %77 = arith.mulf %76, %74 : vector<8x128xf32>
    %78 = arith.mulf %69, %43 : vector<8x128xf32>
    %79 = arith.addf %77, %78 : vector<8x128xf32>
    %80 = arith.index_cast %c1_i32 : i32 to index
    %c0_28 = arith.constant 0 : index
    %c0_29 = arith.constant 0 : index
    %81 = vector.load %arg5[%80, %c0_28, %c0_29] : memref<8x8x128xf32, #tpu.memory_space<vmem>>, vector<1x8x128xf32>
    %82 = vector.shape_cast %81 : vector<1x8x128xf32> to vector<8x128xf32>
    %83 = vector.shape_cast %79 : vector<8x128xf32> to vector<1x8x128xf32>
    tpu.vector_store %arg5[%80, %c0_28, %c0_29], %83 {strides = array<i32>} : memref<8x8x128xf32, #tpu.memory_space<vmem>>, vector<1x8x128xf32>,
    %c2_i32 = arith.constant 2 : i32
    %84 = arith.index_cast %c2_i32 : i32 to index
    %c0_30 = arith.constant 0 : index
    %c0_31 = arith.constant 0 : index
    %85 = vector.load %arg7[%84, %c0_30, %c0_31] : memref<8x8x384xf32, #tpu.memory_space<vmem>>, vector<1x8x384xf32>
    %86 = vector.shape_cast %85 : vector<1x8x384xf32> to vector<8x384xf32>
    %cst_32 = arith.constant dense<0.000000e+00> : vector<8x384xf32>
    %87 = tpu.matmul %79, %9, %cst_32 {dimension_numbers = #tpu.dot_dimension_numbers<[1], [0], [0], [1], [0, 0, 1, 1], [], []>} : vector<8x128xf32>, vector<128x384xf32>, vector<8x384xf32> -> vector<8x384xf32>
    %88 = vector.broadcast %10 : vector<1x384xf32> to vector<8x384xf32>
    %89 = arith.addf %87, %88 : vector<8x384xf32>
    %90 = vector.extract_strided_slice %86 {offsets = [0, 0], sizes = [8, 128], strides = [1, 1]} : vector<8x384xf32> to vector<8x128xf32>
    %91 = vector.extract_strided_slice %89 {offsets = [0, 0], sizes = [8, 128], strides = [1, 1]} : vector<8x384xf32> to vector<8x128xf32>
    %92 = arith.addf %90, %91 : vector<8x128xf32>
    %93 = arith.negf %92 : vector<8x128xf32>
    %94 = math.exp %93 : vector<8x128xf32>
    %cst_33 = arith.constant 1.000000e+00 : f32
    %95 = vector.broadcast %cst_33 : f32 to vector<8x128xf32>
    %96 = arith.addf %95, %94 : vector<8x128xf32>
    %97 = arith.divf %95, %96 : vector<8x128xf32>
    %98 = vector.extract_strided_slice %86 {offsets = [0, 128], sizes = [8, 128], strides = [1, 1]} : vector<8x384xf32> to vector<8x128xf32>
    %99 = vector.extract_strided_slice %89 {offsets = [0, 128], sizes = [8, 128], strides = [1, 1]} : vector<8x384xf32> to vector<8x128xf32>
    %100 = arith.addf %98, %99 : vector<8x128xf32>
    %101 = arith.negf %100 : vector<8x128xf32>
    %102 = math.exp %101 : vector<8x128xf32>
    %cst_34 = arith.constant 1.000000e+00 : f32
    %103 = vector.broadcast %cst_34 : f32 to vector<8x128xf32>
    %104 = arith.addf %103, %102 : vector<8x128xf32>
    %105 = arith.divf %103, %104 : vector<8x128xf32>
    %106 = vector.extract_strided_slice %86 {offsets = [0, 256], sizes = [8, 128], strides = [1, 1]} : vector<8x384xf32> to vector<8x128xf32>
    %107 = vector.extract_strided_slice %89 {offsets = [0, 256], sizes = [8, 128], strides = [1, 1]} : vector<8x384xf32> to vector<8x128xf32>
    %108 = arith.mulf %97, %107 : vector<8x128xf32>
    %109 = arith.addf %106, %108 : vector<8x128xf32>
    %110 = math.tanh %109 : vector<8x128xf32>
    %cst_35 = arith.constant 1.000000e+00 : f32
    %111 = vector.broadcast %cst_35 : f32 to vector<8x128xf32>
    %112 = arith.subf %111, %105 : vector<8x128xf32>
    %113 = arith.mulf %112, %110 : vector<8x128xf32>
    %114 = arith.mulf %105, %79 : vector<8x128xf32>
    %115 = arith.addf %113, %114 : vector<8x128xf32>
    %116 = arith.index_cast %c2_i32 : i32 to index
    %c0_36 = arith.constant 0 : index
    %c0_37 = arith.constant 0 : index
    %117 = vector.load %arg5[%116, %c0_36, %c0_37] : memref<8x8x128xf32, #tpu.memory_space<vmem>>, vector<1x8x128xf32>
    %118 = vector.shape_cast %117 : vector<1x8x128xf32> to vector<8x128xf32>
    %119 = vector.shape_cast %115 : vector<8x128xf32> to vector<1x8x128xf32>
    tpu.vector_store %arg5[%116, %c0_36, %c0_37], %119 {strides = array<i32>} : memref<8x8x128xf32, #tpu.memory_space<vmem>>, vector<1x8x128xf32>,
    %c3_i32 = arith.constant 3 : i32
    %120 = arith.index_cast %c3_i32 : i32 to index
    %c0_38 = arith.constant 0 : index
    %c0_39 = arith.constant 0 : index
    %121 = vector.load %arg7[%120, %c0_38, %c0_39] : memref<8x8x384xf32, #tpu.memory_space<vmem>>, vector<1x8x384xf32>
    %122 = vector.shape_cast %121 : vector<1x8x384xf32> to vector<8x384xf32>
    %cst_40 = arith.constant dense<0.000000e+00> : vector<8x384xf32>
    %123 = tpu.matmul %115, %9, %cst_40 {dimension_numbers = #tpu.dot_dimension_numbers<[1], [0], [0], [1], [0, 0, 1, 1], [], []>} : vector<8x128xf32>, vector<128x384xf32>, vector<8x384xf32> -> vector<8x384xf32>
    %124 = vector.broadcast %10 : vector<1x384xf32> to vector<8x384xf32>
    %125 = arith.addf %123, %124 : vector<8x384xf32>
    %126 = vector.extract_strided_slice %122 {offsets = [0, 0], sizes = [8, 128], strides = [1, 1]} : vector<8x384xf32> to vector<8x128xf32>
    %127 = vector.extract_strided_slice %125 {offsets = [0, 0], sizes = [8, 128], strides = [1, 1]} : vector<8x384xf32> to vector<8x128xf32>
    %128 = arith.addf %126, %127 : vector<8x128xf32>
    %129 = arith.negf %128 : vector<8x128xf32>
    %130 = math.exp %129 : vector<8x128xf32>
    %cst_41 = arith.constant 1.000000e+00 : f32
    %131 = vector.broadcast %cst_41 : f32 to vector<8x128xf32>
    %132 = arith.addf %131, %130 : vector<8x128xf32>
    %133 = arith.divf %131, %132 : vector<8x128xf32>
    %134 = vector.extract_strided_slice %122 {offsets = [0, 128], sizes = [8, 128], strides = [1, 1]} : vector<8x384xf32> to vector<8x128xf32>
    %135 = vector.extract_strided_slice %125 {offsets = [0, 128], sizes = [8, 128], strides = [1, 1]} : vector<8x384xf32> to vector<8x128xf32>
    %136 = arith.addf %134, %135 : vector<8x128xf32>
    %137 = arith.negf %136 : vector<8x128xf32>
    %138 = math.exp %137 : vector<8x128xf32>
    %cst_42 = arith.constant 1.000000e+00 : f32
    %139 = vector.broadcast %cst_42 : f32 to vector<8x128xf32>
    %140 = arith.addf %139, %138 : vector<8x128xf32>
    %141 = arith.divf %139, %140 : vector<8x128xf32>
    %142 = vector.extract_strided_slice %122 {offsets = [0, 256], sizes = [8, 128], strides = [1, 1]} : vector<8x384xf32> to vector<8x128xf32>
    %143 = vector.extract_strided_slice %125 {offsets = [0, 256], sizes = [8, 128], strides = [1, 1]} : vector<8x384xf32> to vector<8x128xf32>
    %144 = arith.mulf %133, %143 : vector<8x128xf32>
    %145 = arith.addf %142, %144 : vector<8x128xf32>
    %146 = math.tanh %145 : vector<8x128xf32>
    %cst_43 = arith.constant 1.000000e+00 : f32
    %147 = vector.broadcast %cst_43 : f32 to vector<8x128xf32>
    %148 = arith.subf %147, %141 : vector<8x128xf32>
    %149 = arith.mulf %148, %146 : vector<8x128xf32>
    %150 = arith.mulf %141, %115 : vector<8x128xf32>
    %151 = arith.addf %149, %150 : vector<8x128xf32>
    %152 = arith.index_cast %c3_i32 : i32 to index
    %c0_44 = arith.constant 0 : index
    %c0_45 = arith.constant 0 : index
    %153 = vector.load %arg5[%152, %c0_44, %c0_45] : memref<8x8x128xf32, #tpu.memory_space<vmem>>, vector<1x8x128xf32>
    %154 = vector.shape_cast %153 : vector<1x8x128xf32> to vector<8x128xf32>
    %155 = vector.shape_cast %151 : vector<8x128xf32> to vector<1x8x128xf32>
    tpu.vector_store %arg5[%152, %c0_44, %c0_45], %155 {strides = array<i32>} : memref<8x8x128xf32, #tpu.memory_space<vmem>>, vector<1x8x128xf32>,
    %c4_i32 = arith.constant 4 : i32
    %156 = arith.index_cast %c4_i32 : i32 to index
    %c0_46 = arith.constant 0 : index
    %c0_47 = arith.constant 0 : index
    %157 = vector.load %arg7[%156, %c0_46, %c0_47] : memref<8x8x384xf32, #tpu.memory_space<vmem>>, vector<1x8x384xf32>
    %158 = vector.shape_cast %157 : vector<1x8x384xf32> to vector<8x384xf32>
    %cst_48 = arith.constant dense<0.000000e+00> : vector<8x384xf32>
    %159 = tpu.matmul %151, %9, %cst_48 {dimension_numbers = #tpu.dot_dimension_numbers<[1], [0], [0], [1], [0, 0, 1, 1], [], []>} : vector<8x128xf32>, vector<128x384xf32>, vector<8x384xf32> -> vector<8x384xf32>
    %160 = vector.broadcast %10 : vector<1x384xf32> to vector<8x384xf32>
    %161 = arith.addf %159, %160 : vector<8x384xf32>
    %162 = vector.extract_strided_slice %158 {offsets = [0, 0], sizes = [8, 128], strides = [1, 1]} : vector<8x384xf32> to vector<8x128xf32>
    %163 = vector.extract_strided_slice %161 {offsets = [0, 0], sizes = [8, 128], strides = [1, 1]} : vector<8x384xf32> to vector<8x128xf32>
    %164 = arith.addf %162, %163 : vector<8x128xf32>
    %165 = arith.negf %164 : vector<8x128xf32>
    %166 = math.exp %165 : vector<8x128xf32>
    %cst_49 = arith.constant 1.000000e+00 : f32
    %167 = vector.broadcast %cst_49 : f32 to vector<8x128xf32>
    %168 = arith.addf %167, %166 : vector<8x128xf32>
    %169 = arith.divf %167, %168 : vector<8x128xf32>
    %170 = vector.extract_strided_slice %158 {offsets = [0, 128], sizes = [8, 128], strides = [1, 1]} : vector<8x384xf32> to vector<8x128xf32>
    %171 = vector.extract_strided_slice %161 {offsets = [0, 128], sizes = [8, 128], strides = [1, 1]} : vector<8x384xf32> to vector<8x128xf32>
    %172 = arith.addf %170, %171 : vector<8x128xf32>
    %173 = arith.negf %172 : vector<8x128xf32>
    %174 = math.exp %173 : vector<8x128xf32>
    %cst_50 = arith.constant 1.000000e+00 : f32
    %175 = vector.broadcast %cst_50 : f32 to vector<8x128xf32>
    %176 = arith.addf %175, %174 : vector<8x128xf32>
    %177 = arith.divf %175, %176 : vector<8x128xf32>
    %178 = vector.extract_strided_slice %158 {offsets = [0, 256], sizes = [8, 128], strides = [1, 1]} : vector<8x384xf32> to vector<8x128xf32>
    %179 = vector.extract_strided_slice %161 {offsets = [0, 256], sizes = [8, 128], strides = [1, 1]} : vector<8x384xf32> to vector<8x128xf32>
    %180 = arith.mulf %169, %179 : vector<8x128xf32>
    %181 = arith.addf %178, %180 : vector<8x128xf32>
    %182 = math.tanh %181 : vector<8x128xf32>
    %cst_51 = arith.constant 1.000000e+00 : f32
    %183 = vector.broadcast %cst_51 : f32 to vector<8x128xf32>
    %184 = arith.subf %183, %177 : vector<8x128xf32>
    %185 = arith.mulf %184, %182 : vector<8x128xf32>
    %186 = arith.mulf %177, %151 : vector<8x128xf32>
    %187 = arith.addf %185, %186 : vector<8x128xf32>
    %188 = arith.index_cast %c4_i32 : i32 to index
    %c0_52 = arith.constant 0 : index
    %c0_53 = arith.constant 0 : index
    %189 = vector.load %arg5[%188, %c0_52, %c0_53] : memref<8x8x128xf32, #tpu.memory_space<vmem>>, vector<1x8x128xf32>
    %190 = vector.shape_cast %189 : vector<1x8x128xf32> to vector<8x128xf32>
    %191 = vector.shape_cast %187 : vector<8x128xf32> to vector<1x8x128xf32>
    tpu.vector_store %arg5[%188, %c0_52, %c0_53], %191 {strides = array<i32>} : memref<8x8x128xf32, #tpu.memory_space<vmem>>, vector<1x8x128xf32>,
    %c5_i32 = arith.constant 5 : i32
    %192 = arith.index_cast %c5_i32 : i32 to index
    %c0_54 = arith.constant 0 : index
    %c0_55 = arith.constant 0 : index
    %193 = vector.load %arg7[%192, %c0_54, %c0_55] : memref<8x8x384xf32, #tpu.memory_space<vmem>>, vector<1x8x384xf32>
    %194 = vector.shape_cast %193 : vector<1x8x384xf32> to vector<8x384xf32>
    %cst_56 = arith.constant dense<0.000000e+00> : vector<8x384xf32>
    %195 = tpu.matmul %187, %9, %cst_56 {dimension_numbers = #tpu.dot_dimension_numbers<[1], [0], [0], [1], [0, 0, 1, 1], [], []>} : vector<8x128xf32>, vector<128x384xf32>, vector<8x384xf32> -> vector<8x384xf32>
    %196 = vector.broadcast %10 : vector<1x384xf32> to vector<8x384xf32>
    %197 = arith.addf %195, %196 : vector<8x384xf32>
    %198 = vector.extract_strided_slice %194 {offsets = [0, 0], sizes = [8, 128], strides = [1, 1]} : vector<8x384xf32> to vector<8x128xf32>
    %199 = vector.extract_strided_slice %197 {offsets = [0, 0], sizes = [8, 128], strides = [1, 1]} : vector<8x384xf32> to vector<8x128xf32>
    %200 = arith.addf %198, %199 : vector<8x128xf32>
    %201 = arith.negf %200 : vector<8x128xf32>
    %202 = math.exp %201 : vector<8x128xf32>
    %cst_57 = arith.constant 1.000000e+00 : f32
    %203 = vector.broadcast %cst_57 : f32 to vector<8x128xf32>
    %204 = arith.addf %203, %202 : vector<8x128xf32>
    %205 = arith.divf %203, %204 : vector<8x128xf32>
    %206 = vector.extract_strided_slice %194 {offsets = [0, 128], sizes = [8, 128], strides = [1, 1]} : vector<8x384xf32> to vector<8x128xf32>
    %207 = vector.extract_strided_slice %197 {offsets = [0, 128], sizes = [8, 128], strides = [1, 1]} : vector<8x384xf32> to vector<8x128xf32>
    %208 = arith.addf %206, %207 : vector<8x128xf32>
    %209 = arith.negf %208 : vector<8x128xf32>
    %210 = math.exp %209 : vector<8x128xf32>
    %cst_58 = arith.constant 1.000000e+00 : f32
    %211 = vector.broadcast %cst_58 : f32 to vector<8x128xf32>
    %212 = arith.addf %211, %210 : vector<8x128xf32>
    %213 = arith.divf %211, %212 : vector<8x128xf32>
    %214 = vector.extract_strided_slice %194 {offsets = [0, 256], sizes = [8, 128], strides = [1, 1]} : vector<8x384xf32> to vector<8x128xf32>
    %215 = vector.extract_strided_slice %197 {offsets = [0, 256], sizes = [8, 128], strides = [1, 1]} : vector<8x384xf32> to vector<8x128xf32>
    %216 = arith.mulf %205, %215 : vector<8x128xf32>
    %217 = arith.addf %214, %216 : vector<8x128xf32>
    %218 = math.tanh %217 : vector<8x128xf32>
    %cst_59 = arith.constant 1.000000e+00 : f32
    %219 = vector.broadcast %cst_59 : f32 to vector<8x128xf32>
    %220 = arith.subf %219, %213 : vector<8x128xf32>
    %221 = arith.mulf %220, %218 : vector<8x128xf32>
    %222 = arith.mulf %213, %187 : vector<8x128xf32>
    %223 = arith.addf %221, %222 : vector<8x128xf32>
    %224 = arith.index_cast %c5_i32 : i32 to index
    %c0_60 = arith.constant 0 : index
    %c0_61 = arith.constant 0 : index
    %225 = vector.load %arg5[%224, %c0_60, %c0_61] : memref<8x8x128xf32, #tpu.memory_space<vmem>>, vector<1x8x128xf32>
    %226 = vector.shape_cast %225 : vector<1x8x128xf32> to vector<8x128xf32>
    %227 = vector.shape_cast %223 : vector<8x128xf32> to vector<1x8x128xf32>
    tpu.vector_store %arg5[%224, %c0_60, %c0_61], %227 {strides = array<i32>} : memref<8x8x128xf32, #tpu.memory_space<vmem>>, vector<1x8x128xf32>,
    %c6_i32 = arith.constant 6 : i32
    %228 = arith.index_cast %c6_i32 : i32 to index
    %c0_62 = arith.constant 0 : index
    %c0_63 = arith.constant 0 : index
    %229 = vector.load %arg7[%228, %c0_62, %c0_63] : memref<8x8x384xf32, #tpu.memory_space<vmem>>, vector<1x8x384xf32>
    %230 = vector.shape_cast %229 : vector<1x8x384xf32> to vector<8x384xf32>
    %cst_64 = arith.constant dense<0.000000e+00> : vector<8x384xf32>
    %231 = tpu.matmul %223, %9, %cst_64 {dimension_numbers = #tpu.dot_dimension_numbers<[1], [0], [0], [1], [0, 0, 1, 1], [], []>} : vector<8x128xf32>, vector<128x384xf32>, vector<8x384xf32> -> vector<8x384xf32>
    %232 = vector.broadcast %10 : vector<1x384xf32> to vector<8x384xf32>
    %233 = arith.addf %231, %232 : vector<8x384xf32>
    %234 = vector.extract_strided_slice %230 {offsets = [0, 0], sizes = [8, 128], strides = [1, 1]} : vector<8x384xf32> to vector<8x128xf32>
    %235 = vector.extract_strided_slice %233 {offsets = [0, 0], sizes = [8, 128], strides = [1, 1]} : vector<8x384xf32> to vector<8x128xf32>
    %236 = arith.addf %234, %235 : vector<8x128xf32>
    %237 = arith.negf %236 : vector<8x128xf32>
    %238 = math.exp %237 : vector<8x128xf32>
    %cst_65 = arith.constant 1.000000e+00 : f32
    %239 = vector.broadcast %cst_65 : f32 to vector<8x128xf32>
    %240 = arith.addf %239, %238 : vector<8x128xf32>
    %241 = arith.divf %239, %240 : vector<8x128xf32>
    %242 = vector.extract_strided_slice %230 {offsets = [0, 128], sizes = [8, 128], strides = [1, 1]} : vector<8x384xf32> to vector<8x128xf32>
    %243 = vector.extract_strided_slice %233 {offsets = [0, 128], sizes = [8, 128], strides = [1, 1]} : vector<8x384xf32> to vector<8x128xf32>
    %244 = arith.addf %242, %243 : vector<8x128xf32>
    %245 = arith.negf %244 : vector<8x128xf32>
    %246 = math.exp %245 : vector<8x128xf32>
    %cst_66 = arith.constant 1.000000e+00 : f32
    %247 = vector.broadcast %cst_66 : f32 to vector<8x128xf32>
    %248 = arith.addf %247, %246 : vector<8x128xf32>
    %249 = arith.divf %247, %248 : vector<8x128xf32>
    %250 = vector.extract_strided_slice %230 {offsets = [0, 256], sizes = [8, 128], strides = [1, 1]} : vector<8x384xf32> to vector<8x128xf32>
    %251 = vector.extract_strided_slice %233 {offsets = [0, 256], sizes = [8, 128], strides = [1, 1]} : vector<8x384xf32> to vector<8x128xf32>
    %252 = arith.mulf %241, %251 : vector<8x128xf32>
    %253 = arith.addf %250, %252 : vector<8x128xf32>
    %254 = math.tanh %253 : vector<8x128xf32>
    %cst_67 = arith.constant 1.000000e+00 : f32
    %255 = vector.broadcast %cst_67 : f32 to vector<8x128xf32>
    %256 = arith.subf %255, %249 : vector<8x128xf32>
    %257 = arith.mulf %256, %254 : vector<8x128xf32>
    %258 = arith.mulf %249, %223 : vector<8x128xf32>
    %259 = arith.addf %257, %258 : vector<8x128xf32>
    %260 = arith.index_cast %c6_i32 : i32 to index
    %c0_68 = arith.constant 0 : index
    %c0_69 = arith.constant 0 : index
    %261 = vector.load %arg5[%260, %c0_68, %c0_69] : memref<8x8x128xf32, #tpu.memory_space<vmem>>, vector<1x8x128xf32>
    %262 = vector.shape_cast %261 : vector<1x8x128xf32> to vector<8x128xf32>
    %263 = vector.shape_cast %259 : vector<8x128xf32> to vector<1x8x128xf32>
    tpu.vector_store %arg5[%260, %c0_68, %c0_69], %263 {strides = array<i32>} : memref<8x8x128xf32, #tpu.memory_space<vmem>>, vector<1x8x128xf32>,
    %c7_i32 = arith.constant 7 : i32
    %264 = arith.index_cast %c7_i32 : i32 to index
    %c0_70 = arith.constant 0 : index
    %c0_71 = arith.constant 0 : index
    %265 = vector.load %arg7[%264, %c0_70, %c0_71] : memref<8x8x384xf32, #tpu.memory_space<vmem>>, vector<1x8x384xf32>
    %266 = vector.shape_cast %265 : vector<1x8x384xf32> to vector<8x384xf32>
    %cst_72 = arith.constant dense<0.000000e+00> : vector<8x384xf32>
    %267 = tpu.matmul %259, %9, %cst_72 {dimension_numbers = #tpu.dot_dimension_numbers<[1], [0], [0], [1], [0, 0, 1, 1], [], []>} : vector<8x128xf32>, vector<128x384xf32>, vector<8x384xf32> -> vector<8x384xf32>
    %268 = vector.broadcast %10 : vector<1x384xf32> to vector<8x384xf32>
    %269 = arith.addf %267, %268 : vector<8x384xf32>
    %270 = vector.extract_strided_slice %266 {offsets = [0, 0], sizes = [8, 128], strides = [1, 1]} : vector<8x384xf32> to vector<8x128xf32>
    %271 = vector.extract_strided_slice %269 {offsets = [0, 0], sizes = [8, 128], strides = [1, 1]} : vector<8x384xf32> to vector<8x128xf32>
    %272 = arith.addf %270, %271 : vector<8x128xf32>
    %273 = arith.negf %272 : vector<8x128xf32>
    %274 = math.exp %273 : vector<8x128xf32>
    %cst_73 = arith.constant 1.000000e+00 : f32
    %275 = vector.broadcast %cst_73 : f32 to vector<8x128xf32>
    %276 = arith.addf %275, %274 : vector<8x128xf32>
    %277 = arith.divf %275, %276 : vector<8x128xf32>
    %278 = vector.extract_strided_slice %266 {offsets = [0, 128], sizes = [8, 128], strides = [1, 1]} : vector<8x384xf32> to vector<8x128xf32>
    %279 = vector.extract_strided_slice %269 {offsets = [0, 128], sizes = [8, 128], strides = [1, 1]} : vector<8x384xf32> to vector<8x128xf32>
    %280 = arith.addf %278, %279 : vector<8x128xf32>
    %281 = arith.negf %280 : vector<8x128xf32>
    %282 = math.exp %281 : vector<8x128xf32>
    %cst_74 = arith.constant 1.000000e+00 : f32
    %283 = vector.broadcast %cst_74 : f32 to vector<8x128xf32>
    %284 = arith.addf %283, %282 : vector<8x128xf32>
    %285 = arith.divf %283, %284 : vector<8x128xf32>
    %286 = vector.extract_strided_slice %266 {offsets = [0, 256], sizes = [8, 128], strides = [1, 1]} : vector<8x384xf32> to vector<8x128xf32>
    %287 = vector.extract_strided_slice %269 {offsets = [0, 256], sizes = [8, 128], strides = [1, 1]} : vector<8x384xf32> to vector<8x128xf32>
    %288 = arith.mulf %277, %287 : vector<8x128xf32>
    %289 = arith.addf %286, %288 : vector<8x128xf32>
    %290 = math.tanh %289 : vector<8x128xf32>
    %cst_75 = arith.constant 1.000000e+00 : f32
    %291 = vector.broadcast %cst_75 : f32 to vector<8x128xf32>
    %292 = arith.subf %291, %285 : vector<8x128xf32>
    %293 = arith.mulf %292, %290 : vector<8x128xf32>
    %294 = arith.mulf %285, %259 : vector<8x128xf32>
    %295 = arith.addf %293, %294 : vector<8x128xf32>
    %296 = arith.index_cast %c7_i32 : i32 to index
    %c0_76 = arith.constant 0 : index
    %c0_77 = arith.constant 0 : index
    %297 = vector.load %arg5[%296, %c0_76, %c0_77] : memref<8x8x128xf32, #tpu.memory_space<vmem>>, vector<1x8x128xf32>
    %298 = vector.shape_cast %297 : vector<1x8x128xf32> to vector<8x128xf32>
    %299 = vector.shape_cast %295 : vector<8x128xf32> to vector<1x8x128xf32>
    tpu.vector_store %arg5[%296, %c0_76, %c0_77], %299 {strides = array<i32>} : memref<8x8x128xf32, #tpu.memory_space<vmem>>, vector<1x8x128xf32>,
    %c8_i32 = arith.constant 8 : i32
    %c0_78 = arith.constant 0 : index
    %c0_79 = arith.constant 0 : index
    %300 = vector.load %arg6[%c0_78, %c0_79] : memref<8x128xf32, #tpu.memory_space<vmem>>, vector<8x128xf32>
    tpu.vector_store %arg6[%c0_78, %c0_79], %295 {strides = array<i32>} : memref<8x128xf32, #tpu.memory_space<vmem>>, vector<8x128xf32>,
    return
  }
}

</mosaic_0001>

<llo_original>
// kernel: tpu_custom_call.1
$region0: #{tpu_custom_call.1}
  #allocation0 [shape = 'u32[]', space=smem, size = 0x4, offset = 0x4, fixed_abs, tag = 'smem constant byte address 0x4 - core index']
  #allocation1 [shape = 'u32[144,128]{1,0:T(1,128)}', space=vmem, size = 0x12000, scoped, tag = 'internal scratch']
  #allocation2 [shape = 'f32[8,8,384]{2,1,0:T(8,128)}', space=vmem, size = 0x18000, scoped, tag = 'scratch operand']
  %s0 = inlined_call_operand.hbm [shape: f32[8,8,128], index: 0, kind: input, shape index: {}]
  %s1 = inlined_call_operand.hbm [shape: f32[128,384], index: 1, kind: input, shape index: {}]
  %s2 = inlined_call_operand.hbm [shape: f32[128,384], index: 2, kind: input, shape index: {}]
  %s3 = inlined_call_operand.vmem [shape: f32[1,384], index: 3, kind: input, shape index: {}]
  %s4 = inlined_call_operand.vmem [shape: f32[1,384], index: 4, kind: input, shape index: {}]
  %s5 = inlined_call_operand.hbm [shape: f32[8,8,128], index: 5, kind: output, shape index: {0}]
  %s6 = inlined_call_operand.hbm [shape: f32[8,128], index: 6, kind: output, shape index: {1}]
  %7 = xla_tuple %s5, %s6
  %s8 = sld [smem:[#allocation0]]
  $region50: #{tpu_custom_call.1} parent=0
    _
  %s10 = ssub.s32 1, %s8
  %s11 = scalar_select 0, %s10, %s8
  $region1: #{tpu_custom_call.1} parent=0
    #allocation3 [shape = 'u8[32768]{0}', space=vmem, size = 0x8000, scoped, tag = 'input window, operand 0, single buffered']
    #allocation4 [shape = 's32[1]{0}', space=sflag, size = 0x4, scoped, tag = 'scoped memory for tpu_custom_call.1']
    #allocation5 [shape = 's32[1]{0}', space=sflag, size = 0x4, scoped, tag = 'scoped memory for tpu_custom_call.1']
    #allocation6 [shape = 'u8[196608]{0}', space=vmem, size = 0x30000, scoped, tag = 'input window, operand 1, single buffered']
    #allocation7 [shape = 's32[1]{0}', space=sflag, size = 0x4, scoped, tag = 'scoped memory for tpu_custom_call.1']
    #allocation8 [shape = 'u8[196608]{0}', space=vmem, size = 0x30000, scoped, tag = 'input window, operand 2, single buffered']
    #allocation9 [shape = 'u8[32768]{0}', space=vmem, size = 0x8000, scoped, tag = 'output window, operand 0, single buffered']
    #allocation10 [shape = 'u8[4096]{0}', space=vmem, size = 0x1000, scoped, tag = 'output window, operand 1, single buffered']
    #allocation11 [shape = 's32[1]{0}', space=sflag, size = 0x4, scoped, tag = 'scoped memory for tpu_custom_call.1']
    %12 = vsyncpa [#allocation4], 0
    %13 = vsyncpa [#allocation7], 0
    %14 = vsyncpa [#allocation5], 0
    %15 = vsyncpa [#allocation11], 0
    // Predicated region
    $region2: #{tpu_custom_call.1} parent=1 // pred_check
      _
    $region3: #{tpu_custom_call.1} parent=1 // pred_check_branch
      %17 = sbr.rel (0) target = $region5
    $region4: #{tpu_custom_call.1} parent=1 // pred_region
      %s19 = ssub.s32 1024, 1024
      %20 = vsyncadd [#allocation4], %s19
      %s21 = sshll.u32 [#allocation3], 4
      %s22 = int_to_ptr.vmem [resolvable:$true] %s21
      %27 = dma.hbm_to_vmem [thread:$0]  %s0, 1024, %s22, [#allocation4], 128, 128, 8
    $region5: #{tpu_custom_call.1} parent=1 // pred_fallthru
      _
    // Predicated region
    $region6: #{tpu_custom_call.1} parent=1 // pred_check
      _
    $region7: #{tpu_custom_call.1} parent=1 // pred_check_branch
      %29 = sbr.rel (0) target = $region9
    $region8: #{tpu_custom_call.1} parent=1 // pred_region
      %s31 = ssub.s32 6144, 6144
      %32 = vsyncadd [#allocation7], %s31
      %s33 = sshll.u32 [#allocation6], 4
      %s34 = int_to_ptr.vmem [resolvable:$true] %s33
      %39 = dma.hbm_to_vmem [thread:$0]  %s1, 6144, %s34, [#allocation7], 384, 384, 24
    $region9: #{tpu_custom_call.1} parent=1 // pred_fallthru
      _
    // Predicated region
    $region10: #{tpu_custom_call.1} parent=1 // pred_check
      _
    $region11: #{tpu_custom_call.1} parent=1 // pred_check_branch
      %41 = sbr.rel (0) target = $region13
    $region12: #{tpu_custom_call.1} parent=1 // pred_region
      %s43 = ssub.s32 6144, 6144
      %44 = vsyncadd [#allocation7], %s43
      %s45 = sshll.u32 [#allocation8], 4
      %s46 = int_to_ptr.vmem [resolvable:$true] %s45
      %51 = dma.hbm_to_vmem [thread:$0]  %s2, 6144, %s46, [#allocation7], 384, 384, 24
    $region13: #{tpu_custom_call.1} parent=1 // pred_fallthru
      _
    // Predicated region
    $region14: #{tpu_custom_call.1} parent=1 // pred_check
      _
    $region15: #{tpu_custom_call.1} parent=1 // pred_check_branch
      %53 = sbr.rel (0) target = $region17
    $region16: #{tpu_custom_call.1} parent=1 // pred_region
      _
    $region17: #{tpu_custom_call.1} parent=1 // pred_fallthru
      _
    // Predicated region
    $region18: #{tpu_custom_call.1} parent=1 // pred_check
      _
    $region19: #{tpu_custom_call.1} parent=1 // pred_check_branch
      %55 = sbr.rel (0) target = $region21
    $region20: #{tpu_custom_call.1} parent=1 // pred_region
      _
    $region21: #{tpu_custom_call.1} parent=1 // pred_fallthru
      _
    // Predicated region
    $region22: #{tpu_custom_call.1} parent=1 // pred_check
      _
    $region23: #{tpu_custom_call.1} parent=1 // pred_check_branch
      %57 = sbr.rel (0) target = $region25
    $region24: #{tpu_custom_call.1} parent=1 // pred_region
      %58 = dma.done [#allocation4], 1024
    $region25: #{tpu_custom_call.1} parent=1 // pred_fallthru
      _
    // Predicated region
    $region26: #{tpu_custom_call.1} parent=1 // pred_check
      _
    $region27: #{tpu_custom_call.1} parent=1 // pred_check_branch
      %60 = sbr.rel (0) target = $region29
    $region28: #{tpu_custom_call.1} parent=1 // pred_region
      %61 = dma.done [#allocation7], 6144
    $region29: #{tpu_custom_call.1} parent=1 // pred_fallthru
      _
    // Predicated region
    $region30: #{tpu_custom_call.1} parent=1 // pred_check
      _
    $region31: #{tpu_custom_call.1} parent=1 // pred_check_branch
      %63 = sbr.rel (0) target = $region33
    $region32: #{tpu_custom_call.1} parent=1 // pred_region
      %64 = dma.done [#allocation7], 6144
    $region33: #{tpu_custom_call.1} parent=1 // pred_fallthru
      _
    %v65 = vld [vmem:[#allocation3] sm:$0xff]
    %v66 = vld [vmem:[#allocation3 + $0x8] sm:$0xff]
    %v67 = vld [vmem:[#allocation3 + $0x10] sm:$0xff]
    %v68 = vld [vmem:[#allocation3 + $0x18] sm:$0xff]
    %v69 = vld [vmem:[#allocation3 + $0x20] sm:$0xff]
    %v70 = vld [vmem:[#allocation3 + $0x28] sm:$0xff]
    %v71 = vld [vmem:[#allocation3 + $0x30] sm:$0xff]
    %v72 = vld [vmem:[#allocation3 + $0x38] sm:$0xff]
    %v73 = vld [vmem:[#allocation6] sm:$0xff]
    %v74 = vld [vmem:[#allocation6 + $0x8] sm:$0xff]
    %v75 = vld [vmem:[#allocation6 + $0x10] sm:$0xff]
    %v76 = vld [vmem:[#allocation6 + $0x18] sm:$0xff]
    %v77 = vld [vmem:[#allocation6 + $0x20] sm:$0xff]
    %v78 = vld [vmem:[#allocation6 + $0x28] sm:$0xff]
    %v79 = vld [vmem:[#allocation6 + $0x30] sm:$0xff]
    %v80 = vld [vmem:[#allocation6 + $0x38] sm:$0xff]
    %v81 = vld [vmem:[#allocation6 + $0x40] sm:$0xff]
    %v82 = vld [vmem:[#allocation6 + $0x48] sm:$0xff]
    %v83 = vld [vmem:[#allocation6 + $0x50] sm:$0xff]
    %v84 = vld [vmem:[#allocation6 + $0x58] sm:$0xff]
    %v85 = vld [vmem:[#allocation6 + $0x60] sm:$0xff]
    %v86 = vld [vmem:[#allocation6 + $0x68] sm:$0xff]
    %v87 = vld [vmem:[#allocation6 + $0x70] sm:$0xff]
    %v88 = vld [vmem:[#allocation6 + $0x78] sm:$0xff]
    %v89 = vld [vmem:[#allocation6 + $0x80] sm:$0xff]
    %v90 = vld [vmem:[#allocation6 + $0x88] sm:$0xff]
    %v91 = vld [vmem:[#allocation6 + $0x90] sm:$0xff]
    %v92 = vld [vmem:[#allocation6 + $0x98] sm:$0xff]
    %v93 = vld [vmem:[#allocation6 + $0xa0] sm:$0xff]
    %v94 = vld [vmem:[#allocation6 + $0xa8] sm:$0xff]
    %v95 = vld [vmem:[#allocation6 + $0xb0] sm:$0xff]
    %v96 = vld [vmem:[#allocation6 + $0xb8] sm:$0xff]
    %v97 = vld [vmem:[#allocation6 + $0xc0] sm:$0xff]
    %v98 = vld [vmem:[#allocation6 + $0xc8] sm:$0xff]
    %v99 = vld [vmem:[#allocation6 + $0xd0] sm:$0xff]
    %v100 = vld [vmem:[#allocation6 + $0xd8] sm:$0xff]
    %v101 = vld [vmem:[#allocation6 + $0xe0] sm:$0xff]
    %v102 = vld [vmem:[#allocation6 + $0xe8] sm:$0xff]
    %v103 = vld [vmem:[#allocation6 + $0xf0] sm:$0xff]
    %v104 = vld [vmem:[#allocation6 + $0xf8] sm:$0xff]
    %v105 = vld [vmem:[#allocation6 + $0x100] sm:$0xff]
    %v106 = vld [vmem:[#allocation6 + $0x108] sm:$0xff]
    %v107 = vld [vmem:[#allocation6 + $0x110] sm:$0xff]
    %v108 = vld [vmem:[#allocation6 + $0x118] sm:$0xff]
    %v109 = vld [vmem:[#allocation6 + $0x120] sm:$0xff]
    %v110 = vld [vmem:[#allocation6 + $0x128] sm:$0xff]
    %v111 = vld [vmem:[#allocation6 + $0x130] sm:$0xff]
    %v112 = vld [vmem:[#allocation6 + $0x138] sm:$0xff]
    %v113 = vld [vmem:[#allocation6 + $0x140] sm:$0xff]
    %v114 = vld [vmem:[#allocation6 + $0x148] sm:$0xff]
    %v115 = vld [vmem:[#allocation6 + $0x150] sm:$0xff]
    %v116 = vld [vmem:[#allocation6 + $0x158] sm:$0xff]
    %v117 = vld [vmem:[#allocation6 + $0x160] sm:$0xff]
    %v118 = vld [vmem:[#allocation6 + $0x168] sm:$0xff]
    %v119 = vld [vmem:[#allocation6 + $0x170] sm:$0xff]
    %v120 = vld [vmem:[#allocation6 + $0x178] sm:$0xff]
    %v121 = vld [vmem:[%s3] sm:$0x7]
    %v123 = vlaneseq
    %v124 = vshrl.u32 %v123, 7
    %v125 = vsub.s32 0, %v124
    %v126 = vrot.slane %v121, %v125
    %v127 = vlaneseq
    %v128 = vshrl.u32 %v127, 7
    %v129 = vsub.s32 1, %v128
    %v130 = vrot.slane %v121, %v129
    %v131 = vlaneseq
    %v132 = vshrl.u32 %v131, 7
    %v133 = vsub.s32 2, %v132
    %v134 = vrot.slane %v121, %v133
    %138 = vmatprep.subr.mxu0 %v119
    %139 = vmatpush1.msra.mxu0 %v118
    %140 = vmatprep.subr.mxu0 %v116
    %141 = vmatpush1.msra.mxu0 %v115
    %142 = vmatprep.subr.mxu0 %v113
    %143 = vmatpush1.msra.mxu0 %v112
    %144 = vmatprep.subr.mxu0 %v110
    %145 = vmatpush1.msra.mxu0 %v109
    %146 = vmatprep.subr.mxu0 %v107
    %147 = vmatpush1.msra.mxu0 %v106
    %148 = vmatprep.subr.mxu0 %v104
    %149 = vmatpush1.msra.mxu0 %v103
    %150 = vmatprep.subr.mxu0 %v101
    %151 = vmatpush1.msra.mxu0 %v100
    %152 = vmatprep.subr.mxu0 %v98
    %153 = vmatpush1.msra.mxu0 %v97
    %154 = vmatprep.subr.mxu0 %v95
    %155 = vmatpush1.msra.mxu0 %v94
    %156 = vmatprep.subr.mxu0 %v92
    %157 = vmatpush1.msra.mxu0 %v91
    %158 = vmatprep.subr.mxu0 %v89
    %159 = vmatpush1.msra.mxu0 %v88
    %160 = vmatprep.subr.mxu0 %v86
    %161 = vmatpush1.msra.mxu0 %v85
    %162 = vmatprep.subr.mxu0 %v83
    %163 = vmatpush1.msra.mxu0 %v82
    %164 = vmatprep.subr.mxu0 %v80
    %165 = vmatpush1.msra.mxu0 %v79
    %166 = vmatprep.subr.mxu0 %v77
    %167 = vmatpush1.msra.mxu0 %v76
    %168 = vmatprep.subr.mxu0 %v74
    %169 = vmatpush1.msra.mxu0 %v73
    %170 = vmatprep.subr.mxu0 0.0
    %171 = vmatpush2.msra.mxu0 0.0
    %172 = vmatprep.subr.mxu0 0.0
    %173 = vmatpush2.msra.mxu0 0.0
    %174 = vmatprep.subr.mxu0 0.0
    %175 = vmatpush2.msra.mxu0 0.0
    %176 = vmatprep.subr.mxu0 0.0
    %177 = vmatpush2.msra.mxu0 0.0
    %178 = vmatprep.subr.mxu0 0.0
    %179 = vmatpush2.msra.mxu0 0.0
    %180 = vmatprep.subr.mxu0 0.0
    %181 = vmatpush2.msra.mxu0 0.0
    %182 = vmatprep.subr.mxu0 0.0
    %183 = vmatpush2.msra.mxu0 0.0
    %184 = vmatprep.subr.mxu0 0.0
    %185 = vmatpush2.msra.mxu0 0.0
    %186 = vmatprep.subr.mxu0 0.0
    %187 = vmatpush2.msra.mxu0 0.0
    %188 = vmatprep.subr.mxu0 0.0
    %189 = vmatpush2.msra.mxu0 0.0
    %190 = vmatprep.subr.mxu0 0.0
    %191 = vmatpush2.msra.mxu0 0.0
    %192 = vmatprep.subr.mxu0 0.0
    %193 = vmatpush2.msra.mxu0 0.0
    %194 = vmatprep.subr.mxu0 0.0
    %195 = vmatpush2.msra.mxu0 0.0
    %196 = vmatprep.subr.mxu0 0.0
    %197 = vmatpush2.msra.mxu0 0.0
    %198 = vmatprep.subr.mxu0 0.0
    %199 = vmatpush2.msra.mxu0 0.0
    %200 = vmatprep.subr.mxu0 0.0
    %201 = vmatpush2.msra.mxu0 0.0
    %202 = vmatprep.mubr.f32.mxu0 0.0
    %203 = vmatmul.mubr.f32.gmra.mxu0 %v65
    %v204 = vpop.f32.mrf.mxu0
    %v205 = vadd.f32 %v126, %v204
    %v206 = vpop.f32.mrf.mxu0
    %v207 = vadd.f32 %v130, %v206
    %208 = vmatprep.mubr.f32.mxu0 0.0
    %209 = vmatmul.mubr.f32.gmra.mxu0 %v66
    %v210 = vpop.f32.mrf.mxu0
    %v211 = vadd.f32 %v126, %v210
    %v212 = vpop.f32.mrf.mxu0
    %v213 = vadd.f32 %v130, %v212
    %214 = vmatprep.mubr.f32.mxu0 0.0
    %215 = vmatmul.mubr.f32.gmra.mxu0 %v67
    %v216 = vpop.f32.mrf.mxu0
    %v217 = vadd.f32 %v126, %v216
    %v218 = vpop.f32.mrf.mxu0
    %v219 = vadd.f32 %v130, %v218
    %220 = vmatprep.mubr.f32.mxu0 0.0
    %221 = vmatmul.mubr.f32.gmra.mxu0 %v68
    %v222 = vpop.f32.mrf.mxu0
    %v223 = vadd.f32 %v126, %v222
    %v224 = vpop.f32.mrf.mxu0
    %v225 = vadd.f32 %v130, %v224
    %226 = vmatprep.mubr.f32.mxu0 0.0
    %227 = vmatmul.mubr.f32.gmra.mxu0 %v69
    %v228 = vpop.f32.mrf.mxu0
    %v229 = vadd.f32 %v126, %v228
    %v230 = vpop.f32.mrf.mxu0
    %v231 = vadd.f32 %v130, %v230
    %232 = vmatprep.mubr.f32.mxu0 0.0
    %233 = vmatmul.mubr.f32.gmra.mxu0 %v70
    %v234 = vpop.f32.mrf.mxu0
    %v235 = vadd.f32 %v126, %v234
    %v236 = vpop.f32.mrf.mxu0
    %v237 = vadd.f32 %v130, %v236
    %238 = vmatprep.mubr.f32.mxu0 0.0
    %239 = vmatmul.mubr.f32.gmra.mxu0 %v71
    %v240 = vpop.f32.mrf.mxu0
    %v241 = vadd.f32 %v126, %v240
    %v242 = vpop.f32.mrf.mxu0
    %v243 = vadd.f32 %v130, %v242
    %244 = vmatprep.mubr.f32.mxu0 0.0
    %245 = vmatmul.mubr.f32.gmra.mxu0 %v72
    %v246 = vpop.f32.mrf.mxu0
    %v247 = vadd.f32 %v126, %v246
    %v248 = vpop.f32.mrf.mxu0
    %v249 = vadd.f32 %v130, %v248
    %250 = vdwg.mxu0
    %251 = vmatprep.subr.mxu0 0.0
    %252 = vmatpush1.msra.mxu0 %v120
    %253 = vmatprep.subr.mxu0 0.0
    %254 = vmatpush1.msra.mxu0 %v117
    %255 = vmatprep.subr.mxu0 0.0
    %256 = vmatpush1.msra.mxu0 %v114
    %257 = vmatprep.subr.mxu0 0.0
    %258 = vmatpush1.msra.mxu0 %v111
    %259 = vmatprep.subr.mxu0 0.0
    %260 = vmatpush1.msra.mxu0 %v108
    %261 = vmatprep.subr.mxu0 0.0
    %262 = vmatpush1.msra.mxu0 %v105
    %263 = vmatprep.subr.mxu0 0.0
    %264 = vmatpush1.msra.mxu0 %v102
    %265 = vmatprep.subr.mxu0 0.0
    %266 = vmatpush1.msra.mxu0 %v99
    %267 = vmatprep.subr.mxu0 0.0
    %268 = vmatpush1.msra.mxu0 %v96
    %269 = vmatprep.subr.mxu0 0.0
    %270 = vmatpush1.msra.mxu0 %v93
    %271 = vmatprep.subr.mxu0 0.0
    %272 = vmatpush1.msra.mxu0 %v90
    %273 = vmatprep.subr.mxu0 0.0
    %274 = vmatpush1.msra.mxu0 %v87
    %275 = vmatprep.subr.mxu0 0.0
    %276 = vmatpush1.msra.mxu0 %v84
    %277 = vmatprep.subr.mxu0 0.0
    %278 = vmatpush1.msra.mxu0 %v81
    %279 = vmatprep.subr.mxu0 0.0
    %280 = vmatpush1.msra.mxu0 %v78
    %281 = vmatprep.subr.mxu0 0.0
    %282 = vmatpush1.msra.mxu0 %v75
    %283 = vmatprep.subr.mxu0 0.0
    %284 = vmatpush2.msra.mxu0 0.0
    %285 = vmatprep.subr.mxu0 0.0
    %286 = vmatpush2.msra.mxu0 0.0
    %287 = vmatprep.subr.mxu0 0.0
    %288 = vmatpush2.msra.mxu0 0.0
    %289 = vmatprep.subr.mxu0 0.0
    %290 = vmatpush2.msra.mxu0 0.0
    %291 = vmatprep.subr.mxu0 0.0
    %292 = vmatpush2.msra.mxu0 0.0
    %293 = vmatprep.subr.mxu0 0.0
    %294 = vmatpush2.msra.mxu0 0.0
    %295 = vmatprep.subr.mxu0 0.0
    %296 = vmatpush2.msra.mxu0 0.0
    %297 = vmatprep.subr.mxu0 0.0
    %298 = vmatpush2.msra.mxu0 0.0
    %299 = vmatprep.subr.mxu0 0.0
    %300 = vmatpush2.msra.mxu0 0.0
    %301 = vmatprep.subr.mxu0 0.0
    %302 = vmatpush2.msra.mxu0 0.0
    %303 = vmatprep.subr.mxu0 0.0
    %304 = vmatpush2.msra.mxu0 0.0
    %305 = vmatprep.subr.mxu0 0.0
    %306 = vmatpush2.msra.mxu0 0.0
    %307 = vmatprep.subr.mxu0 0.0
    %308 = vmatpush2.msra.mxu0 0.0
    %309 = vmatprep.subr.mxu0 0.0
    %310 = vmatpush2.msra.mxu0 0.0
    %311 = vmatprep.subr.mxu0 0.0
    %312 = vmatpush2.msra.mxu0 0.0
    %313 = vmatprep.subr.mxu0 0.0
    %314 = vmatpush2.msra.mxu0 0.0
    %315 = vmatprep.mubr.f32.mxu0 0.0
    %316 = vmatmul.mubr.f32.gmra.mxu0 %v65
    %v317 = vpop.f32.mrf.mxu0
    %v318 = vadd.f32 %v134, %v317
    %v319 = vpop.f32.mrf.mxu0
    %320 = vmatprep.mubr.f32.mxu0 0.0
    %321 = vmatmul.mubr.f32.gmra.mxu0 %v66
    %v322 = vpop.f32.mrf.mxu0
    %v323 = vadd.f32 %v134, %v322
    %v324 = vpop.f32.mrf.mxu0
    %325 = vmatprep.mubr.f32.mxu0 0.0
    %326 = vmatmul.mubr.f32.gmra.mxu0 %v67
    %v327 = vpop.f32.mrf.mxu0
    %v328 = vadd.f32 %v134, %v327
    %v329 = vpop.f32.mrf.mxu0
    %330 = vmatprep.mubr.f32.mxu0 0.0
    %331 = vmatmul.mubr.f32.gmra.mxu0 %v68
    %v332 = vpop.f32.mrf.mxu0
    %v333 = vadd.f32 %v134, %v332
    %v334 = vpop.f32.mrf.mxu0
    %335 = vmatprep.mubr.f32.mxu0 0.0
    %336 = vmatmul.mubr.f32.gmra.mxu0 %v69
    %v337 = vpop.f32.mrf.mxu0
    %v338 = vadd.f32 %v134, %v337
    %v339 = vpop.f32.mrf.mxu0
    %340 = vmatprep.mubr.f32.mxu0 0.0
    %341 = vmatmul.mubr.f32.gmra.mxu0 %v70
    %v342 = vpop.f32.mrf.mxu0
    %v343 = vadd.f32 %v134, %v342
    %v344 = vpop.f32.mrf.mxu0
    %345 = vmatprep.mubr.f32.mxu0 0.0
    %346 = vmatmul.mubr.f32.gmra.mxu0 %v71
    %v347 = vpop.f32.mrf.mxu0
    %v348 = vadd.f32 %v134, %v347
    %v349 = vpop.f32.mrf.mxu0
    %350 = vmatprep.mubr.f32.mxu0 0.0
    %351 = vmatmul.mubr.f32.gmra.mxu0 %v72
    %v352 = vpop.f32.mrf.mxu0
    %v353 = vadd.f32 %v134, %v352
    %v354 = vpop.f32.mrf.mxu0
    %355 = vdwg.mxu0
    %356 = vst [vmem:[#allocation2] sm:$0xff] %v205
    %357 = vst [vmem:[#allocation2 + $0x8] sm:$0xff] %v207
    %358 = vst [vmem:[#allocation2 + $0x10] sm:$0xff] %v318
    %359 = vst [vmem:[#allocation2 + $0x18] sm:$0xff] %v211
    %360 = vst [vmem:[#allocation2 + $0x20] sm:$0xff] %v213
    %361 = vst [vmem:[#allocation2 + $0x28] sm:$0xff] %v323
    %362 = vst [vmem:[#allocation2 + $0x30] sm:$0xff] %v217
    %363 = vst [vmem:[#allocation2 + $0x38] sm:$0xff] %v219
    %364 = vst [vmem:[#allocation2 + $0x40] sm:$0xff] %v328
    %365 = vst [vmem:[#allocation2 + $0x48] sm:$0xff] %v223
    %366 = vst [vmem:[#allocation2 + $0x50] sm:$0xff] %v225
    %367 = vst [vmem:[#allocation2 + $0x58] sm:$0xff] %v333
    %368 = vst [vmem:[#allocation2 + $0x60] sm:$0xff] %v229
    %369 = vst [vmem:[#allocation2 + $0x68] sm:$0xff] %v231
    %370 = vst [vmem:[#allocation2 + $0x70] sm:$0xff] %v338
    %371 = vst [vmem:[#allocation2 + $0x78] sm:$0xff] %v235
    %372 = vst [vmem:[#allocation2 + $0x80] sm:$0xff] %v237
    %373 = vst [vmem:[#allocation2 + $0x88] sm:$0xff] %v343
    %374 = vst [vmem:[#allocation2 + $0x90] sm:$0xff] %v241
    %375 = vst [vmem:[#allocation2 + $0x98] sm:$0xff] %v243
    %376 = vst [vmem:[#allocation2 + $0xa0] sm:$0xff] %v348
    %377 = vst [vmem:[#allocation2 + $0xa8] sm:$0xff] %v247
    %378 = vst [vmem:[#allocation2 + $0xb0] sm:$0xff] %v249
    %379 = vst [vmem:[#allocation2 + $0xb8] sm:$0xff] %v353
    %v380 = vld [vmem:[#allocation8] sm:$0xff]
    %v381 = vld [vmem:[#allocation8 + $0x8] sm:$0xff]
    %v382 = vld [vmem:[#allocation8 + $0x10] sm:$0xff]
    %v383 = vld [vmem:[#allocation8 + $0x18] sm:$0xff]
    %v384 = vld [vmem:[#allocation8 + $0x20] sm:$0xff]
    %v385 = vld [vmem:[#allocation8 + $0x28] sm:$0xff]
    %v386 = vld [vmem:[#allocation8 + $0x30] sm:$0xff]
    %v387 = vld [vmem:[#allocation8 + $0x38] sm:$0xff]
    %v388 = vld [vmem:[#allocation8 + $0x40] sm:$0xff]
    %v389 = vld [vmem:[#allocation8 + $0x48] sm:$0xff]
    %v390 = vld [vmem:[#allocation8 + $0x50] sm:$0xff]
    %v391 = vld [vmem:[#allocation8 + $0x58] sm:$0xff]
    %v392 = vld [vmem:[#allocation8 + $0x60] sm:$0xff]
    %v393 = vld [vmem:[#allocation8 + $0x68] sm:$0xff]
    %v394 = vld [vmem:[#allocation8 + $0x70] sm:$0xff]
    %v395 = vld [vmem:[#allocation8 + $0x78] sm:$0xff]
    %v396 = vld [vmem:[#allocation8 + $0x80] sm:$0xff]
    %v397 = vld [vmem:[#allocation8 + $0x88] sm:$0xff]
    %v398 = vld [vmem:[#allocation8 + $0x90] sm:$0xff]
    %v399 = vld [vmem:[#allocation8 + $0x98] sm:$0xff]
    %v400 = vld [vmem:[#allocation8 + $0xa0] sm:$0xff]
    %v401 = vld [vmem:[#allocation8 + $0xa8] sm:$0xff]
    %v402 = vld [vmem:[#allocation8 + $0xb0] sm:$0xff]
    %v403 = vld [vmem:[#allocation8 + $0xb8] sm:$0xff]
    %v404 = vld [vmem:[#allocation8 + $0xc0] sm:$0xff]
    %v405 = vld [vmem:[#allocation8 + $0xc8] sm:$0xff]
    %v406 = vld [vmem:[#allocation8 + $0xd0] sm:$0xff]
    %v407 = vld [vmem:[#allocation8 + $0xd8] sm:$0xff]
    %v408 = vld [vmem:[#allocation8 + $0xe0] sm:$0xff]
    %v409 = vld [vmem:[#allocation8 + $0xe8] sm:$0xff]
    %v410 = vld [vmem:[#allocation8 + $0xf0] sm:$0xff]
    %v411 = vld [vmem:[#allocation8 + $0xf8] sm:$0xff]
    %v412 = vld [vmem:[#allocation8 + $0x100] sm:$0xff]
    %v413 = vld [vmem:[#allocation8 + $0x108] sm:$0xff]
    %v414 = vld [vmem:[#allocation8 + $0x110] sm:$0xff]
    %v415 = vld [vmem:[#allocation8 + $0x118] sm:$0xff]
    %v416 = vld [vmem:[#allocation8 + $0x120] sm:$0xff]
    %v417 = vld [vmem:[#allocation8 + $0x128] sm:$0xff]
    %v418 = vld [vmem:[#allocation8 + $0x130] sm:$0xff]
    %v419 = vld [vmem:[#allocation8 + $0x138] sm:$0xff]
    %v420 = vld [vmem:[#allocation8 + $0x140] sm:$0xff]
    %v421 = vld [vmem:[#allocation8 + $0x148] sm:$0xff]
    %v422 = vld [vmem:[#allocation8 + $0x150] sm:$0xff]
    %v423 = vld [vmem:[#allocation8 + $0x158] sm:$0xff]
    %v424 = vld [vmem:[#allocation8 + $0x160] sm:$0xff]
    %v425 = vld [vmem:[#allocation8 + $0x168] sm:$0xff]
    %v426 = vld [vmem:[#allocation8 + $0x170] sm:$0xff]
    %v427 = vld [vmem:[#allocation8 + $0x178] sm:$0xff]
    %v428 = vld [vmem:[%s4] sm:$0x7]
    %v429 = vld [vmem:[#allocation2] sm:$0xff]
    %v430 = vld [vmem:[#allocation2 + $0x8] sm:$0xff]
    %v431 = vld [vmem:[#allocation2 + $0x10] sm:$0xff]
    %v433 = vlaneseq
    %v434 = vshrl.u32 %v433, 7
    %v435 = vsub.s32 0, %v434
    %v436 = vrot.slane %v428, %v435
    %v437 = vlaneseq
    %v438 = vshrl.u32 %v437, 7
    %v439 = vsub.s32 1, %v438
    %v440 = vrot.slane %v428, %v439
    %v441 = vlaneseq
    %v442 = vshrl.u32 %v441, 7
    %v443 = vsub.s32 2, %v442
    %v444 = vrot.slane %v428, %v443
    %448 = vmatprep.subr.mxu0 %v426
    %449 = vmatpush1.msra.mxu0 %v425
    %450 = vmatprep.subr.mxu0 %v423
    %451 = vmatpush1.msra.mxu0 %v422
    %452 = vmatprep.subr.mxu0 %v420
    %453 = vmatpush1.msra.mxu0 %v419
    %454 = vmatprep.subr.mxu0 %v417
    %455 = vmatpush1.msra.mxu0 %v416
    %456 = vmatprep.subr.mxu0 %v414
    %457 = vmatpush1.msra.mxu0 %v413
    %458 = vmatprep.subr.mxu0 %v411
    %459 = vmatpush1.msra.mxu0 %v410
    %460 = vmatprep.subr.mxu0 %v408
    %461 = vmatpush1.msra.mxu0 %v407
    %462 = vmatprep.subr.mxu0 %v405
    %463 = vmatpush1.msra.mxu0 %v404
    %464 = vmatprep.subr.mxu0 %v402
    %465 = vmatpush1.msra.mxu0 %v401
    %466 = vmatprep.subr.mxu0 %v399
    %467 = vmatpush1.msra.mxu0 %v398
    %468 = vmatprep.subr.mxu0 %v396
    %469 = vmatpush1.msra.mxu0 %v395
    %470 = vmatprep.subr.mxu0 %v393
    %471 = vmatpush1.msra.mxu0 %v392
    %472 = vmatprep.subr.mxu0 %v390
    %473 = vmatpush1.msra.mxu0 %v389
    %474 = vmatprep.subr.mxu0 %v387
    %475 = vmatpush1.msra.mxu0 %v386
    %476 = vmatprep.subr.mxu0 %v384
    %477 = vmatpush1.msra.mxu0 %v383
    %478 = vmatprep.subr.mxu0 %v381
    %479 = vmatpush1.msra.mxu0 %v380
    %480 = vmatprep.subr.mxu0 0.0
    %481 = vmatpush2.msra.mxu0 0.0
    %482 = vmatprep.subr.mxu0 0.0
    %483 = vmatpush2.msra.mxu0 0.0
    %484 = vmatprep.subr.mxu0 0.0
    %485 = vmatpush2.msra.mxu0 0.0
    %486 = vmatprep.subr.mxu0 0.0
    %487 = vmatpush2.msra.mxu0 0.0
    %488 = vmatprep.subr.mxu0 0.0
    %489 = vmatpush2.msra.mxu0 0.0
    %490 = vmatprep.subr.mxu0 0.0
    %491 = vmatpush2.msra.mxu0 0.0
    %492 = vmatprep.subr.mxu0 0.0
    %493 = vmatpush2.msra.mxu0 0.0
    %494 = vmatprep.subr.mxu0 0.0
    %495 = vmatpush2.msra.mxu0 0.0
    %496 = vmatprep.subr.mxu0 0.0
    %497 = vmatpush2.msra.mxu0 0.0
    %498 = vmatprep.subr.mxu0 0.0
    %499 = vmatpush2.msra.mxu0 0.0
    %500 = vmatprep.subr.mxu0 0.0
    %501 = vmatpush2.msra.mxu0 0.0
    %502 = vmatprep.subr.mxu0 0.0
    %503 = vmatpush2.msra.mxu0 0.0
    %504 = vmatprep.subr.mxu0 0.0
    %505 = vmatpush2.msra.mxu0 0.0
    %506 = vmatprep.subr.mxu0 0.0
    %507 = vmatpush2.msra.mxu0 0.0
    %508 = vmatprep.subr.mxu0 0.0
    %509 = vmatpush2.msra.mxu0 0.0
    %510 = vmatprep.subr.mxu0 0.0
    %511 = vmatpush2.msra.mxu0 0.0
    %512 = vmatprep.mubr.f32.mxu0 0.0
    %513 = vmatmul.mubr.f32.gmra.mxu0 0.0
    %v514 = vpop.f32.mrf.mxu0
    %v515 = vadd.f32 %v436, %v514
    %v516 = vpop.f32.mrf.mxu0
    %v517 = vadd.f32 %v440, %v516
    %518 = vdwg.mxu0
    %519 = vmatprep.subr.mxu0 0.0
    %520 = vmatpush1.msra.mxu0 %v427
    %521 = vmatprep.subr.mxu0 0.0
    %522 = vmatpush1.msra.mxu0 %v424
    %523 = vmatprep.subr.mxu0 0.0
    %524 = vmatpush1.msra.mxu0 %v421
    %525 = vmatprep.subr.mxu0 0.0
    %526 = vmatpush1.msra.mxu0 %v418
    %527 = vmatprep.subr.mxu0 0.0
    %528 = vmatpush1.msra.mxu0 %v415
    %529 = vmatprep.subr.mxu0 0.0
    %530 = vmatpush1.msra.mxu0 %v412
    %531 = vmatprep.subr.mxu0 0.0
    %532 = vmatpush1.msra.mxu0 %v409
    %533 = vmatprep.subr.mxu0 0.0
    %534 = vmatpush1.msra.mxu0 %v406
    %535 = vmatprep.subr.mxu0 0.0
    %536 = vmatpush1.msra.mxu0 %v403
    %537 = vmatprep.subr.mxu0 0.0
    %538 = vmatpush1.msra.mxu0 %v400
    %539 = vmatprep.subr.mxu0 0.0
    %540 = vmatpush1.msra.mxu0 %v397
    %541 = vmatprep.subr.mxu0 0.0
    %542 = vmatpush1.msra.mxu0 %v394
    %543 = vmatprep.subr.mxu0 0.0
    %544 = vmatpush1.msra.mxu0 %v391
    %545 = vmatprep.subr.mxu0 0.0
    %546 = vmatpush1.msra.mxu0 %v388
    %547 = vmatprep.subr.mxu0 0.0
    %548 = vmatpush1.msra.mxu0 %v385
    %549 = vmatprep.subr.mxu0 0.0
    %550 = vmatpush1.msra.mxu0 %v382
    %551 = vmatprep.subr.mxu0 0.0
    %552 = vmatpush2.msra.mxu0 0.0
    %553 = vmatprep.subr.mxu0 0.0
    %554 = vmatpush2.msra.mxu0 0.0
    %555 = vmatprep.subr.mxu0 0.0
    %556 = vmatpush2.msra.mxu0 0.0
    %557 = vmatprep.subr.mxu0 0.0
    %558 = vmatpush2.msra.mxu0 0.0
    %559 = vmatprep.subr.mxu0 0.0
    %560 = vmatpush2.msra.mxu0 0.0
    %561 = vmatprep.subr.mxu0 0.0
    %562 = vmatpush2.msra.mxu0 0.0
    %563 = vmatprep.subr.mxu0 0.0
    %564 = vmatpush2.msra.mxu0 0.0
    %565 = vmatprep.subr.mxu0 0.0
    %566 = vmatpush2.msra.mxu0 0.0
    %567 = vmatprep.subr.mxu0 0.0
    %568 = vmatpush2.msra.mxu0 0.0
    %569 = vmatprep.subr.mxu0 0.0
    %570 = vmatpush2.msra.mxu0 0.0
    %571 = vmatprep.subr.mxu0 0.0
    %572 = vmatpush2.msra.mxu0 0.0
    %573 = vmatprep.subr.mxu0 0.0
    %574 = vmatpush2.msra.mxu0 0.0
    %575 = vmatprep.subr.mxu0 0.0
    %576 = vmatpush2.msra.mxu0 0.0
    %577 = vmatprep.subr.mxu0 0.0
    %578 = vmatpush2.msra.mxu0 0.0
    %579 = vmatprep.subr.mxu0 0.0
    %580 = vmatpush2.msra.mxu0 0.0
    %581 = vmatprep.subr.mxu0 0.0
    %582 = vmatpush2.msra.mxu0 0.0
    %583 = vmatprep.mubr.f32.mxu0 0.0
    %584 = vmatmul.mubr.f32.gmra.mxu0 0.0
    %v585 = vpop.f32.mrf.mxu0
    %v586 = vadd.f32 %v444, %v585
    %v587 = vpop.f32.mrf.mxu0
    %588 = vdwg.mxu0
    %v589 = vadd.f32 %v429, %v515
    %v590 = vxor.u32 %v589, 2147483648
    %v591 = vmul.f32 %v590, 1.442695
    %v592 = vpow.pop %v591
    %v593 = vadd.f32 %v592, 1.0
    %v594 = vrcp.pop %v593
    %v595 = vmul.f32 1.0, %v594
    %v596 = vadd.f32 %v430, %v517
    %v597 = vxor.u32 %v596, 2147483648
    %v598 = vmul.f32 %v597, 1.442695
    %v599 = vpow.pop %v598
    %v600 = vadd.f32 %v599, 1.0
    %v601 = vrcp.pop %v600
    %v602 = vmul.f32 1.0, %v601
    %v603 = vmul.f32 %v595, %v586
    %v604 = vadd.f32 %v431, %v603
    %v605 = vtanh.pop %v604
    %v606 = vsub.f32 1.0, %v602
    %v607 = vmul.f32 %v606, %v605
    %v608 = vmul.f32 %v602, 0.0
    %v609 = vadd.f32 %v607, %v608
    %610 = vst [vmem:[#allocation9] sm:$0xff] %v609
    %s611 = scalar_lea.vmem [#allocation2], 24
    %v612 = vld [vmem:[%s611] sm:$0xff]
    %v613 = vld [vmem:[%s611 + $0x8] sm:$0xff]
    %v614 = vld [vmem:[%s611 + $0x10] sm:$0xff]
    %615 = vmatprep.subr.mxu0 %v426
    %616 = vmatpush1.msra.mxu0 %v425
    %617 = vmatprep.subr.mxu0 %v423
    %618 = vmatpush1.msra.mxu0 %v422
    %619 = vmatprep.subr.mxu0 %v420
    %620 = vmatpush1.msra.mxu0 %v419
    %621 = vmatprep.subr.mxu0 %v417
    %622 = vmatpush1.msra.mxu0 %v416
    %623 = vmatprep.subr.mxu0 %v414
    %624 = vmatpush1.msra.mxu0 %v413
    %625 = vmatprep.subr.mxu0 %v411
    %626 = vmatpush1.msra.mxu0 %v410
    %627 = vmatprep.subr.mxu0 %v408
    %628 = vmatpush1.msra.mxu0 %v407
    %629 = vmatprep.subr.mxu0 %v405
    %630 = vmatpush1.msra.mxu0 %v404
    %631 = vmatprep.subr.mxu0 %v402
    %632 = vmatpush1.msra.mxu0 %v401
    %633 = vmatprep.subr.mxu0 %v399
    %634 = vmatpush1.msra.mxu0 %v398
    %635 = vmatprep.subr.mxu0 %v396
    %636 = vmatpush1.msra.mxu0 %v395
    %637 = vmatprep.subr.mxu0 %v393
    %638 = vmatpush1.msra.mxu0 %v392
    %639 = vmatprep.subr.mxu0 %v390
    %640 = vmatpush1.msra.mxu0 %v389
    %641 = vmatprep.subr.mxu0 %v387
    %642 = vmatpush1.msra.mxu0 %v386
    %643 = vmatprep.subr.mxu0 %v384
    %644 = vmatpush1.msra.mxu0 %v383
    %645 = vmatprep.subr.mxu0 %v381
    %646 = vmatpush1.msra.mxu0 %v380
    %647 = vmatprep.subr.mxu0 0.0
    %648 = vmatpush2.msra.mxu0 0.0
    %649 = vmatprep.subr.mxu0 0.0
    %650 = vmatpush2.msra.mxu0 0.0
    %651 = vmatprep.subr.mxu0 0.0
    %652 = vmatpush2.msra.mxu0 0.0
    %653 = vmatprep.subr.mxu0 0.0
    %654 = vmatpush2.msra.mxu0 0.0
    %655 = vmatprep.subr.mxu0 0.0
    %656 = vmatpush2.msra.mxu0 0.0
    %657 = vmatprep.subr.mxu0 0.0
    %658 = vmatpush2.msra.mxu0 0.0
    %659 = vmatprep.subr.mxu0 0.0
    %660 = vmatpush2.msra.mxu0 0.0
    %661 = vmatprep.subr.mxu0 0.0
    %662 = vmatpush2.msra.mxu0 0.0
    %663 = vmatprep.subr.mxu0 0.0
    %664 = vmatpush2.msra.mxu0 0.0
    %665 = vmatprep.subr.mxu0 0.0
    %666 = vmatpush2.msra.mxu0 0.0
    %667 = vmatprep.subr.mxu0 0.0
    %668 = vmatpush2.msra.mxu0 0.0
    %669 = vmatprep.subr.mxu0 0.0
    %670 = vmatpush2.msra.mxu0 0.0
    %671 = vmatprep.subr.mxu0 0.0
    %672 = vmatpush2.msra.mxu0 0.0
    %673 = vmatprep.subr.mxu0 0.0
    %674 = vmatpush2.msra.mxu0 0.0
    %675 = vmatprep.subr.mxu0 0.0
    %676 = vmatpush2.msra.mxu0 0.0
    %677 = vmatprep.subr.mxu0 0.0
    %678 = vmatpush2.msra.mxu0 0.0
    %679 = vmatprep.mubr.f32.mxu0 0.0
    %680 = vmatmul.mubr.f32.gmra.mxu0 %v609
    %v681 = vpop.f32.mrf.mxu0
    %v682 = vadd.f32 %v436, %v681
    %v683 = vpop.f32.mrf.mxu0
    %v684 = vadd.f32 %v440, %v683
    %685 = vdwg.mxu0
    %686 = vmatprep.subr.mxu0 0.0
    %687 = vmatpush1.msra.mxu0 %v427
    %688 = vmatprep.subr.mxu0 0.0
    %689 = vmatpush1.msra.mxu0 %v424
    %690 = vmatprep.subr.mxu0 0.0
    %691 = vmatpush1.msra.mxu0 %v421
    %692 = vmatprep.subr.mxu0 0.0
    %693 = vmatpush1.msra.mxu0 %v418
    %694 = vmatprep.subr.mxu0 0.0
    %695 = vmatpush1.msra.mxu0 %v415
    %696 = vmatprep.subr.mxu0 0.0
    %697 = vmatpush1.msra.mxu0 %v412
    %698 = vmatprep.subr.mxu0 0.0
    %699 = vmatpush1.msra.mxu0 %v409
    %700 = vmatprep.subr.mxu0 0.0
    %701 = vmatpush1.msra.mxu0 %v406
    %702 = vmatprep.subr.mxu0 0.0
    %703 = vmatpush1.msra.mxu0 %v403
    %704 = vmatprep.subr.mxu0 0.0
    %705 = vmatpush1.msra.mxu0 %v400
    %706 = vmatprep.subr.mxu0 0.0
    %707 = vmatpush1.msra.mxu0 %v397
    %708 = vmatprep.subr.mxu0 0.0
    %709 = vmatpush1.msra.mxu0 %v394
    %710 = vmatprep.subr.mxu0 0.0
    %711 = vmatpush1.msra.mxu0 %v391
    %712 = vmatprep.subr.mxu0 0.0
    %713 = vmatpush1.msra.mxu0 %v388
    %714 = vmatprep.subr.mxu0 0.0
    %715 = vmatpush1.msra.mxu0 %v385
    %716 = vmatprep.subr.mxu0 0.0
    %717 = vmatpush1.msra.mxu0 %v382
    %718 = vmatprep.subr.mxu0 0.0
    %719 = vmatpush2.msra.mxu0 0.0
    %720 = vmatprep.subr.mxu0 0.0
    %721 = vmatpush2.msra.mxu0 0.0
    %722 = vmatprep.subr.mxu0 0.0
    %723 = vmatpush2.msra.mxu0 0.0
    %724 = vmatprep.subr.mxu0 0.0
    %725 = vmatpush2.msra.mxu0 0.0
    %726 = vmatprep.subr.mxu0 0.0
    %727 = vmatpush2.msra.mxu0 0.0
    %728 = vmatprep.subr.mxu0 0.0
    %729 = vmatpush2.msra.mxu0 0.0
    %730 = vmatprep.subr.mxu0 0.0
    %731 = vmatpush2.msra.mxu0 0.0
    %732 = vmatprep.subr.mxu0 0.0
    %733 = vmatpush2.msra.mxu0 0.0
    %734 = vmatprep.subr.mxu0 0.0
    %735 = vmatpush2.msra.mxu0 0.0
    %736 = vmatprep.subr.mxu0 0.0
    %737 = vmatpush2.msra.mxu0 0.0
    %738 = vmatprep.subr.mxu0 0.0
    %739 = vmatpush2.msra.mxu0 0.0
    %740 = vmatprep.subr.mxu0 0.0
    %741 = vmatpush2.msra.mxu0 0.0
    %742 = vmatprep.subr.mxu0 0.0
    %743 = vmatpush2.msra.mxu0 0.0
    %744 = vmatprep.subr.mxu0 0.0
    %745 = vmatpush2.msra.mxu0 0.0
    %746 = vmatprep.subr.mxu0 0.0
    %747 = vmatpush2.msra.mxu0 0.0
    %748 = vmatprep.subr.mxu0 0.0
    %749 = vmatpush2.msra.mxu0 0.0
    %750 = vmatprep.mubr.f32.mxu0 0.0
    %751 = vmatmul.mubr.f32.gmra.mxu0 %v609
    %v752 = vpop.f32.mrf.mxu0
    %v753 = vadd.f32 %v444, %v752
    %v754 = vpop.f32.mrf.mxu0
    %755 = vdwg.mxu0
    %v756 = vadd.f32 %v612, %v682
    %v757 = vxor.u32 %v756, 2147483648
    %v758 = vmul.f32 %v757, 1.442695
    %v759 = vpow.pop %v758
    %v760 = vadd.f32 %v759, 1.0
    %v761 = vrcp.pop %v760
    %v762 = vmul.f32 1.0, %v761
    %v763 = vadd.f32 %v613, %v684
    %v764 = vxor.u32 %v763, 2147483648
    %v765 = vmul.f32 %v764, 1.442695
    %v766 = vpow.pop %v765
    %v767 = vadd.f32 %v766, 1.0
    %v768 = vrcp.pop %v767
    %v769 = vmul.f32 1.0, %v768
    %v770 = vmul.f32 %v762, %v753
    %v771 = vadd.f32 %v614, %v770
    %v772 = vtanh.pop %v771
    %v773 = vsub.f32 1.0, %v769
    %v774 = vmul.f32 %v773, %v772
    %v775 = vmul.f32 %v769, %v609
    %v776 = vadd.f32 %v774, %v775
    %s777 = scalar_lea.vmem [#allocation9], 8
    %778 = vst [vmem:[%s777] sm:$0xff] %v776
    %s779 = scalar_lea.vmem [#allocation2], 48
    %v780 = vld [vmem:[%s779] sm:$0xff]
    %v781 = vld [vmem:[%s779 + $0x8] sm:$0xff]
    %v782 = vld [vmem:[%s779 + $0x10] sm:$0xff]
    %783 = vmatprep.subr.mxu0 %v426
    %784 = vmatpush1.msra.mxu0 %v425
    %785 = vmatprep.subr.mxu0 %v423
    %786 = vmatpush1.msra.mxu0 %v422
    %787 = vmatprep.subr.mxu0 %v420
    %788 = vmatpush1.msra.mxu0 %v419
    %789 = vmatprep.subr.mxu0 %v417
    %790 = vmatpush1.msra.mxu0 %v416
    %791 = vmatprep.subr.mxu0 %v414
    %792 = vmatpush1.msra.mxu0 %v413
    %793 = vmatprep.subr.mxu0 %v411
    %794 = vmatpush1.msra.mxu0 %v410
    %795 = vmatprep.subr.mxu0 %v408
    %796 = vmatpush1.msra.mxu0 %v407
    %797 = vmatprep.subr.mxu0 %v405
    %798 = vmatpush1.msra.mxu0 %v404
    %799 = vmatprep.subr.mxu0 %v402
    %800 = vmatpush1.msra.mxu0 %v401
    %801 = vmatprep.subr.mxu0 %v399
    %802 = vmatpush1.msra.mxu0 %v398
    %803 = vmatprep.subr.mxu0 %v396
    %804 = vmatpush1.msra.mxu0 %v395
    %805 = vmatprep.subr.mxu0 %v393
    %806 = vmatpush1.msra.mxu0 %v392
    %807 = vmatprep.subr.mxu0 %v390
    %808 = vmatpush1.msra.mxu0 %v389
    %809 = vmatprep.subr.mxu0 %v387
    %810 = vmatpush1.msra.mxu0 %v386
    %811 = vmatprep.subr.mxu0 %v384
    %812 = vmatpush1.msra.mxu0 %v383
    %813 = vmatprep.subr.mxu0 %v381
    %814 = vmatpush1.msra.mxu0 %v380
    %815 = vmatprep.subr.mxu0 0.0
    %816 = vmatpush2.msra.mxu0 0.0
    %817 = vmatprep.subr.mxu0 0.0
    %818 = vmatpush2.msra.mxu0 0.0
    %819 = vmatprep.subr.mxu0 0.0
    %820 = vmatpush2.msra.mxu0 0.0
    %821 = vmatprep.subr.mxu0 0.0
    %822 = vmatpush2.msra.mxu0 0.0
    %823 = vmatprep.subr.mxu0 0.0
    %824 = vmatpush2.msra.mxu0 0.0
    %825 = vmatprep.subr.mxu0 0.0
    %826 = vmatpush2.msra.mxu0 0.0
    %827 = vmatprep.subr.mxu0 0.0
    %828 = vmatpush2.msra.mxu0 0.0
    %829 = vmatprep.subr.mxu0 0.0
    %830 = vmatpush2.msra.mxu0 0.0
    %831 = vmatprep.subr.mxu0 0.0
    %832 = vmatpush2.msra.mxu0 0.0
    %833 = vmatprep.subr.mxu0 0.0
    %834 = vmatpush2.msra.mxu0 0.0
    %835 = vmatprep.subr.mxu0 0.0
    %836 = vmatpush2.msra.mxu0 0.0
    %837 = vmatprep.subr.mxu0 0.0
    %838 = vmatpush2.msra.mxu0 0.0
    %839 = vmatprep.subr.mxu0 0.0
    %840 = vmatpush2.msra.mxu0 0.0
    %841 = vmatprep.subr.mxu0 0.0
    %842 = vmatpush2.msra.mxu0 0.0
    %843 = vmatprep.subr.mxu0 0.0
    %844 = vmatpush2.msra.mxu0 0.0
    %845 = vmatprep.subr.mxu0 0.0
    %846 = vmatpush2.msra.mxu0 0.0
    %847 = vmatprep.mubr.f32.mxu0 0.0
    %848 = vmatmul.mubr.f32.gmra.mxu0 %v776
    %v849 = vpop.f32.mrf.mxu0
    %v850 = vadd.f32 %v436, %v849
    %v851 = vpop.f32.mrf.mxu0
    %v852 = vadd.f32 %v440, %v851
    %853 = vdwg.mxu0
    %854 = vmatprep.subr.mxu0 0.0
    %855 = vmatpush1.msra.mxu0 %v427
    %856 = vmatprep.subr.mxu0 0.0
    %857 = vmatpush1.msra.mxu0 %v424
    %858 = vmatprep.subr.mxu0 0.0
    %859 = vmatpush1.msra.mxu0 %v421
    %860 = vmatprep.subr.mxu0 0.0
    %861 = vmatpush1.msra.mxu0 %v418
    %862 = vmatprep.subr.mxu0 0.0
    %863 = vmatpush1.msra.mxu0 %v415
    %864 = vmatprep.subr.mxu0 0.0
    %865 = vmatpush1.msra.mxu0 %v412
    %866 = vmatprep.subr.mxu0 0.0
    %867 = vmatpush1.msra.mxu0 %v409
    %868 = vmatprep.subr.mxu0 0.0
    %869 = vmatpush1.msra.mxu0 %v406
    %870 = vmatprep.subr.mxu0 0.0
    %871 = vmatpush1.msra.mxu0 %v403
    %872 = vmatprep.subr.mxu0 0.0
    %873 = vmatpush1.msra.mxu0 %v400
    %874 = vmatprep.subr.mxu0 0.0
    %875 = vmatpush1.msra.mxu0 %v397
    %876 = vmatprep.subr.mxu0 0.0
    %877 = vmatpush1.msra.mxu0 %v394
    %878 = vmatprep.subr.mxu0 0.0
    %879 = vmatpush1.msra.mxu0 %v391
    %880 = vmatprep.subr.mxu0 0.0
    %881 = vmatpush1.msra.mxu0 %v388
    %882 = vmatprep.subr.mxu0 0.0
    %883 = vmatpush1.msra.mxu0 %v385
    %884 = vmatprep.subr.mxu0 0.0
    %885 = vmatpush1.msra.mxu0 %v382
    %886 = vmatprep.subr.mxu0 0.0
    %887 = vmatpush2.msra.mxu0 0.0
    %888 = vmatprep.subr.mxu0 0.0
    %889 = vmatpush2.msra.mxu0 0.0
    %890 = vmatprep.subr.mxu0 0.0
    %891 = vmatpush2.msra.mxu0 0.0
    %892 = vmatprep.subr.mxu0 0.0
    %893 = vmatpush2.msra.mxu0 0.0
    %894 = vmatprep.subr.mxu0 0.0
    %895 = vmatpush2.msra.mxu0 0.0
    %896 = vmatprep.subr.mxu0 0.0
    %897 = vmatpush2.msra.mxu0 0.0
    %898 = vmatprep.subr.mxu0 0.0
    %899 = vmatpush2.msra.mxu0 0.0
    %900 = vmatprep.subr.mxu0 0.0
    %901 = vmatpush2.msra.mxu0 0.0
    %902 = vmatprep.subr.mxu0 0.0
    %903 = vmatpush2.msra.mxu0 0.0
    %904 = vmatprep.subr.mxu0 0.0
    %905 = vmatpush2.msra.mxu0 0.0
    %906 = vmatprep.subr.mxu0 0.0
    %907 = vmatpush2.msra.mxu0 0.0
    %908 = vmatprep.subr.mxu0 0.0
    %909 = vmatpush2.msra.mxu0 0.0
    %910 = vmatprep.subr.mxu0 0.0
    %911 = vmatpush2.msra.mxu0 0.0
    %912 = vmatprep.subr.mxu0 0.0
    %913 = vmatpush2.msra.mxu0 0.0
    %914 = vmatprep.subr.mxu0 0.0
    %915 = vmatpush2.msra.mxu0 0.0
    %916 = vmatprep.subr.mxu0 0.0
    %917 = vmatpush2.msra.mxu0 0.0
    %918 = vmatprep.mubr.f32.mxu0 0.0
    %919 = vmatmul.mubr.f32.gmra.mxu0 %v776
    %v920 = vpop.f32.mrf.mxu0
    %v921 = vadd.f32 %v444, %v920
    %v922 = vpop.f32.mrf.mxu0
    %923 = vdwg.mxu0
    %v924 = vadd.f32 %v780, %v850
    %v925 = vxor.u32 %v924, 2147483648
    %v926 = vmul.f32 %v925, 1.442695
    %v927 = vpow.pop %v926
    %v928 = vadd.f32 %v927, 1.0
    %v929 = vrcp.pop %v928
    %v930 = vmul.f32 1.0, %v929
    %v931 = vadd.f32 %v781, %v852
    %v932 = vxor.u32 %v931, 2147483648
    %v933 = vmul.f32 %v932, 1.442695
    %v934 = vpow.pop %v933
    %v935 = vadd.f32 %v934, 1.0
    %v936 = vrcp.pop %v935
    %v937 = vmul.f32 1.0, %v936
    %v938 = vmul.f32 %v930, %v921
    %v939 = vadd.f32 %v782, %v938
    %v940 = vtanh.pop %v939
    %v941 = vsub.f32 1.0, %v937
    %v942 = vmul.f32 %v941, %v940
    %v943 = vmul.f32 %v937, %v776
    %v944 = vadd.f32 %v942, %v943
    %s945 = scalar_lea.vmem [#allocation9], 16
    %946 = vst [vmem:[%s945] sm:$0xff] %v944
    %s947 = scalar_lea.vmem [#allocation2], 72
    %v948 = vld [vmem:[%s947] sm:$0xff]
    %v949 = vld [vmem:[%s947 + $0x8] sm:$0xff]
    %v950 = vld [vmem:[%s947 + $0x10] sm:$0xff]
    %951 = vmatprep.subr.mxu0 %v426
    %952 = vmatpush1.msra.mxu0 %v425
    %953 = vmatprep.subr.mxu0 %v423
    %954 = vmatpush1.msra.mxu0 %v422
    %955 = vmatprep.subr.mxu0 %v420
    %956 = vmatpush1.msra.mxu0 %v419
    %957 = vmatprep.subr.mxu0 %v417
    %958 = vmatpush1.msra.mxu0 %v416
    %959 = vmatprep.subr.mxu0 %v414
    %960 = vmatpush1.msra.mxu0 %v413
    %961 = vmatprep.subr.mxu0 %v411
    %962 = vmatpush1.msra.mxu0 %v410
    %963 = vmatprep.subr.mxu0 %v408
    %964 = vmatpush1.msra.mxu0 %v407
    %965 = vmatprep.subr.mxu0 %v405
    %966 = vmatpush1.msra.mxu0 %v404
    %967 = vmatprep.subr.mxu0 %v402
    %968 = vmatpush1.msra.mxu0 %v401
    %969 = vmatprep.subr.mxu0 %v399
    %970 = vmatpush1.msra.mxu0 %v398
    %971 = vmatprep.subr.mxu0 %v396
    %972 = vmatpush1.msra.mxu0 %v395
    %973 = vmatprep.subr.mxu0 %v393
    %974 = vmatpush1.msra.mxu0 %v392
    %975 = vmatprep.subr.mxu0 %v390
    %976 = vmatpush1.msra.mxu0 %v389
    %977 = vmatprep.subr.mxu0 %v387
    %978 = vmatpush1.msra.mxu0 %v386
    %979 = vmatprep.subr.mxu0 %v384
    %980 = vmatpush1.msra.mxu0 %v383
    %981 = vmatprep.subr.mxu0 %v381
    %982 = vmatpush1.msra.mxu0 %v380
    %983 = vmatprep.subr.mxu0 0.0
    %984 = vmatpush2.msra.mxu0 0.0
    %985 = vmatprep.subr.mxu0 0.0
    %986 = vmatpush2.msra.mxu0 0.0
    %987 = vmatprep.subr.mxu0 0.0
    %988 = vmatpush2.msra.mxu0 0.0
    %989 = vmatprep.subr.mxu0 0.0
    %990 = vmatpush2.msra.mxu0 0.0
    %991 = vmatprep.subr.mxu0 0.0
    %992 = vmatpush2.msra.mxu0 0.0
    %993 = vmatprep.subr.mxu0 0.0
    %994 = vmatpush2.msra.mxu0 0.0
    %995 = vmatprep.subr.mxu0 0.0
    %996 = vmatpush2.msra.mxu0 0.0
    %997 = vmatprep.subr.mxu0 0.0
    %998 = vmatpush2.msra.mxu0 0.0
    %999 = vmatprep.subr.mxu0 0.0
    %1000 = vmatpush2.msra.mxu0 0.0
    %1001 = vmatprep.subr.mxu0 0.0
    %1002 = vmatpush2.msra.mxu0 0.0
    %1003 = vmatprep.subr.mxu0 0.0
    %1004 = vmatpush2.msra.mxu0 0.0
    %1005 = vmatprep.subr.mxu0 0.0
    %1006 = vmatpush2.msra.mxu0 0.0
    %1007 = vmatprep.subr.mxu0 0.0
    %1008 = vmatpush2.msra.mxu0 0.0
    %1009 = vmatprep.subr.mxu0 0.0
    %1010 = vmatpush2.msra.mxu0 0.0
    %1011 = vmatprep.subr.mxu0 0.0
    %1012 = vmatpush2.msra.mxu0 0.0
    %1013 = vmatprep.subr.mxu0 0.0
    %1014 = vmatpush2.msra.mxu0 0.0
    %1015 = vmatprep.mubr.f32.mxu0 0.0
    %1016 = vmatmul.mubr.f32.gmra.mxu0 %v944
    %v1017 = vpop.f32.mrf.mxu0
    %v1018 = vadd.f32 %v436, %v1017
    %v1019 = vpop.f32.mrf.mxu0
    %v1020 = vadd.f32 %v440, %v1019
    %1021 = vdwg.mxu0
    %1022 = vmatprep.subr.mxu0 0.0
    %1023 = vmatpush1.msra.mxu0 %v427
    %1024 = vmatprep.subr.mxu0 0.0
    %1025 = vmatpush1.msra.mxu0 %v424
    %1026 = vmatprep.subr.mxu0 0.0
    %1027 = vmatpush1.msra.mxu0 %v421
    %1028 = vmatprep.subr.mxu0 0.0
    %1029 = vmatpush1.msra.mxu0 %v418
    %1030 = vmatprep.subr.mxu0 0.0
    %1031 = vmatpush1.msra.mxu0 %v415
    %1032 = vmatprep.subr.mxu0 0.0
    %1033 = vmatpush1.msra.mxu0 %v412
    %1034 = vmatprep.subr.mxu0 0.0
    %1035 = vmatpush1.msra.mxu0 %v409
    %1036 = vmatprep.subr.mxu0 0.0
    %1037 = vmatpush1.msra.mxu0 %v406
    %1038 = vmatprep.subr.mxu0 0.0
    %1039 = vmatpush1.msra.mxu0 %v403
    %1040 = vmatprep.subr.mxu0 0.0
    %1041 = vmatpush1.msra.mxu0 %v400
    %1042 = vmatprep.subr.mxu0 0.0
    %1043 = vmatpush1.msra.mxu0 %v397
    %1044 = vmatprep.subr.mxu0 0.0
    %1045 = vmatpush1.msra.mxu0 %v394
    %1046 = vmatprep.subr.mxu0 0.0
    %1047 = vmatpush1.msra.mxu0 %v391
    %1048 = vmatprep.subr.mxu0 0.0
    %1049 = vmatpush1.msra.mxu0 %v388
    %1050 = vmatprep.subr.mxu0 0.0
    %1051 = vmatpush1.msra.mxu0 %v385
    %1052 = vmatprep.subr.mxu0 0.0
    %1053 = vmatpush1.msra.mxu0 %v382
    %1054 = vmatprep.subr.mxu0 0.0
    %1055 = vmatpush2.msra.mxu0 0.0
    %1056 = vmatprep.subr.mxu0 0.0
    %1057 = vmatpush2.msra.mxu0 0.0
    %1058 = vmatprep.subr.mxu0 0.0
    %1059 = vmatpush2.msra.mxu0 0.0
    %1060 = vmatprep.subr.mxu0 0.0
    %1061 = vmatpush2.msra.mxu0 0.0
    %1062 = vmatprep.subr.mxu0 0.0
    %1063 = vmatpush2.msra.mxu0 0.0
    %1064 = vmatprep.subr.mxu0 0.0
    %1065 = vmatpush2.msra.mxu0 0.0
    %1066 = vmatprep.subr.mxu0 0.0
    %1067 = vmatpush2.msra.mxu0 0.0
    %1068 = vmatprep.subr.mxu0 0.0
    %1069 = vmatpush2.msra.mxu0 0.0
    %1070 = vmatprep.subr.mxu0 0.0
    %1071 = vmatpush2.msra.mxu0 0.0
    %1072 = vmatprep.subr.mxu0 0.0
    %1073 = vmatpush2.msra.mxu0 0.0
    %1074 = vmatprep.subr.mxu0 0.0
    %1075 = vmatpush2.msra.mxu0 0.0
    %1076 = vmatprep.subr.mxu0 0.0
    %1077 = vmatpush2.msra.mxu0 0.0
    %1078 = vmatprep.subr.mxu0 0.0
    %1079 = vmatpush2.msra.mxu0 0.0
    %1080 = vmatprep.subr.mxu0 0.0
    %1081 = vmatpush2.msra.mxu0 0.0
    %1082 = vmatprep.subr.mxu0 0.0
    %1083 = vmatpush2.msra.mxu0 0.0
    %1084 = vmatprep.subr.mxu0 0.0
    %1085 = vmatpush2.msra.mxu0 0.0
    %1086 = vmatprep.mubr.f32.mxu0 0.0
    %1087 = vmatmul.mubr.f32.gmra.mxu0 %v944
    %v1088 = vpop.f32.mrf.mxu0
    %v1089 = vadd.f32 %v444, %v1088
    %v1090 = vpop.f32.mrf.mxu0
    %1091 = vdwg.mxu0
    %v1092 = vadd.f32 %v948, %v1018
    %v1093 = vxor.u32 %v1092, 2147483648
    %v1094 = vmul.f32 %v1093, 1.442695
    %v1095 = vpow.pop %v1094
    %v1096 = vadd.f32 %v1095, 1.0
    %v1097 = vrcp.pop %v1096
    %v1098 = vmul.f32 1.0, %v1097
    %v1099 = vadd.f32 %v949, %v1020
    %v1100 = vxor.u32 %v1099, 2147483648
    %v1101 = vmul.f32 %v1100, 1.442695
    %v1102 = vpow.pop %v1101
    %v1103 = vadd.f32 %v1102, 1.0
    %v1104 = vrcp.pop %v1103
    %v1105 = vmul.f32 1.0, %v1104
    %v1106 = vmul.f32 %v1098, %v1089
    %v1107 = vadd.f32 %v950, %v1106
    %v1108 = vtanh.pop %v1107
    %v1109 = vsub.f32 1.0, %v1105
    %v1110 = vmul.f32 %v1109, %v1108
    %v1111 = vmul.f32 %v1105, %v944
    %v1112 = vadd.f32 %v1110, %v1111
    %s1113 = scalar_lea.vmem [#allocation9], 24
    %1114 = vst [vmem:[%s1113] sm:$0xff] %v1112
    %s1115 = scalar_lea.vmem [#allocation2], 96
    %v1116 = vld [vmem:[%s1115] sm:$0xff]
    %v1117 = vld [vmem:[%s1115 + $0x8] sm:$0xff]
    %v1118 = vld [vmem:[%s1115 + $0x10] sm:$0xff]
    %1119 = vmatprep.subr.mxu0 %v426
    %1120 = vmatpush1.msra.mxu0 %v425
    %1121 = vmatprep.subr.mxu0 %v423
    %1122 = vmatpush1.msra.mxu0 %v422
    %1123 = vmatprep.subr.mxu0 %v420
    %1124 = vmatpush1.msra.mxu0 %v419
    %1125 = vmatprep.subr.mxu0 %v417
    %1126 = vmatpush1.msra.mxu0 %v416
    %1127 = vmatprep.subr.mxu0 %v414
    %1128 = vmatpush1.msra.mxu0 %v413
    %1129 = vmatprep.subr.mxu0 %v411
    %1130 = vmatpush1.msra.mxu0 %v410
    %1131 = vmatprep.subr.mxu0 %v408
    %1132 = vmatpush1.msra.mxu0 %v407
    %1133 = vmatprep.subr.mxu0 %v405
    %1134 = vmatpush1.msra.mxu0 %v404
    %1135 = vmatprep.subr.mxu0 %v402
    %1136 = vmatpush1.msra.mxu0 %v401
    %1137 = vmatprep.subr.mxu0 %v399
    %1138 = vmatpush1.msra.mxu0 %v398
    %1139 = vmatprep.subr.mxu0 %v396
    %1140 = vmatpush1.msra.mxu0 %v395
    %1141 = vmatprep.subr.mxu0 %v393
    %1142 = vmatpush1.msra.mxu0 %v392
    %1143 = vmatprep.subr.mxu0 %v390
    %1144 = vmatpush1.msra.mxu0 %v389
    %1145 = vmatprep.subr.mxu0 %v387
    %1146 = vmatpush1.msra.mxu0 %v386
    %1147 = vmatprep.subr.mxu0 %v384
    %1148 = vmatpush1.msra.mxu0 %v383
    %1149 = vmatprep.subr.mxu0 %v381
    %1150 = vmatpush1.msra.mxu0 %v380
    %1151 = vmatprep.subr.mxu0 0.0
    %1152 = vmatpush2.msra.mxu0 0.0
    %1153 = vmatprep.subr.mxu0 0.0
    %1154 = vmatpush2.msra.mxu0 0.0
    %1155 = vmatprep.subr.mxu0 0.0
    %1156 = vmatpush2.msra.mxu0 0.0
    %1157 = vmatprep.subr.mxu0 0.0
    %1158 = vmatpush2.msra.mxu0 0.0
    %1159 = vmatprep.subr.mxu0 0.0
    %1160 = vmatpush2.msra.mxu0 0.0
    %1161 = vmatprep.subr.mxu0 0.0
    %1162 = vmatpush2.msra.mxu0 0.0
    %1163 = vmatprep.subr.mxu0 0.0
    %1164 = vmatpush2.msra.mxu0 0.0
    %1165 = vmatprep.subr.mxu0 0.0
    %1166 = vmatpush2.msra.mxu0 0.0
    %1167 = vmatprep.subr.mxu0 0.0
    %1168 = vmatpush2.msra.mxu0 0.0
    %1169 = vmatprep.subr.mxu0 0.0
    %1170 = vmatpush2.msra.mxu0 0.0
    %1171 = vmatprep.subr.mxu0 0.0
    %1172 = vmatpush2.msra.mxu0 0.0
    %1173 = vmatprep.subr.mxu0 0.0
    %1174 = vmatpush2.msra.mxu0 0.0
    %1175 = vmatprep.subr.mxu0 0.0
    %1176 = vmatpush2.msra.mxu0 0.0
    %1177 = vmatprep.subr.mxu0 0.0
    %1178 = vmatpush2.msra.mxu0 0.0
    %1179 = vmatprep.subr.mxu0 0.0
    %1180 = vmatpush2.msra.mxu0 0.0
    %1181 = vmatprep.subr.mxu0 0.0
    %1182 = vmatpush2.msra.mxu0 0.0
    %1183 = vmatprep.mubr.f32.mxu0 0.0
    %1184 = vmatmul.mubr.f32.gmra.mxu0 %v1112
    %v1185 = vpop.f32.mrf.mxu0
    %v1186 = vadd.f32 %v436, %v1185
    %v1187 = vpop.f32.mrf.mxu0
    %v1188 = vadd.f32 %v440, %v1187
    %1189 = vdwg.mxu0
    %1190 = vmatprep.subr.mxu0 0.0
    %1191 = vmatpush1.msra.mxu0 %v427
    %1192 = vmatprep.subr.mxu0 0.0
    %1193 = vmatpush1.msra.mxu0 %v424
    %1194 = vmatprep.subr.mxu0 0.0
    %1195 = vmatpush1.msra.mxu0 %v421
    %1196 = vmatprep.subr.mxu0 0.0
    %1197 = vmatpush1.msra.mxu0 %v418
    %1198 = vmatprep.subr.mxu0 0.0
    %1199 = vmatpush1.msra.mxu0 %v415
    %1200 = vmatprep.subr.mxu0 0.0
    %1201 = vmatpush1.msra.mxu0 %v412
    %1202 = vmatprep.subr.mxu0 0.0
    %1203 = vmatpush1.msra.mxu0 %v409
    %1204 = vmatprep.subr.mxu0 0.0
    %1205 = vmatpush1.msra.mxu0 %v406
    %1206 = vmatprep.subr.mxu0 0.0
    %1207 = vmatpush1.msra.mxu0 %v403
    %1208 = vmatprep.subr.mxu0 0.0
    %1209 = vmatpush1.msra.mxu0 %v400
    %1210 = vmatprep.subr.mxu0 0.0
    %1211 = vmatpush1.msra.mxu0 %v397
    %1212 = vmatprep.subr.mxu0 0.0
    %1213 = vmatpush1.msra.mxu0 %v394
    %1214 = vmatprep.subr.mxu0 0.0
    %1215 = vmatpush1.msra.mxu0 %v391
    %1216 = vmatprep.subr.mxu0 0.0
    %1217 = vmatpush1.msra.mxu0 %v388
    %1218 = vmatprep.subr.mxu0 0.0
    %1219 = vmatpush1.msra.mxu0 %v385
    %1220 = vmatprep.subr.mxu0 0.0
    %1221 = vmatpush1.msra.mxu0 %v382
    %1222 = vmatprep.subr.mxu0 0.0
    %1223 = vmatpush2.msra.mxu0 0.0
    %1224 = vmatprep.subr.mxu0 0.0
    %1225 = vmatpush2.msra.mxu0 0.0
    %1226 = vmatprep.subr.mxu0 0.0
    %1227 = vmatpush2.msra.mxu0 0.0
    %1228 = vmatprep.subr.mxu0 0.0
    %1229 = vmatpush2.msra.mxu0 0.0
    %1230 = vmatprep.subr.mxu0 0.0
    %1231 = vmatpush2.msra.mxu0 0.0
    %1232 = vmatprep.subr.mxu0 0.0
    %1233 = vmatpush2.msra.mxu0 0.0
    %1234 = vmatprep.subr.mxu0 0.0
    %1235 = vmatpush2.msra.mxu0 0.0
    %1236 = vmatprep.subr.mxu0 0.0
    %1237 = vmatpush2.msra.mxu0 0.0
    %1238 = vmatprep.subr.mxu0 0.0
    %1239 = vmatpush2.msra.mxu0 0.0
    %1240 = vmatprep.subr.mxu0 0.0
    %1241 = vmatpush2.msra.mxu0 0.0
    %1242 = vmatprep.subr.mxu0 0.0
    %1243 = vmatpush2.msra.mxu0 0.0
    %1244 = vmatprep.subr.mxu0 0.0
    %1245 = vmatpush2.msra.mxu0 0.0
    %1246 = vmatprep.subr.mxu0 0.0
    %1247 = vmatpush2.msra.mxu0 0.0
    %1248 = vmatprep.subr.mxu0 0.0
    %1249 = vmatpush2.msra.mxu0 0.0
    %1250 = vmatprep.subr.mxu0 0.0
    %1251 = vmatpush2.msra.mxu0 0.0
    %1252 = vmatprep.subr.mxu0 0.0
    %1253 = vmatpush2.msra.mxu0 0.0
    %1254 = vmatprep.mubr.f32.mxu0 0.0
    %1255 = vmatmul.mubr.f32.gmra.mxu0 %v1112
    %v1256 = vpop.f32.mrf.mxu0
    %v1257 = vadd.f32 %v444, %v1256
    %v1258 = vpop.f32.mrf.mxu0
    %1259 = vdwg.mxu0
    %v1260 = vadd.f32 %v1116, %v1186
    %v1261 = vxor.u32 %v1260, 2147483648
    %v1262 = vmul.f32 %v1261, 1.442695
    %v1263 = vpow.pop %v1262
    %v1264 = vadd.f32 %v1263, 1.0
    %v1265 = vrcp.pop %v1264
    %v1266 = vmul.f32 1.0, %v1265
    %v1267 = vadd.f32 %v1117, %v1188
    %v1268 = vxor.u32 %v1267, 2147483648
    %v1269 = vmul.f32 %v1268, 1.442695
    %v1270 = vpow.pop %v1269
    %v1271 = vadd.f32 %v1270, 1.0
    %v1272 = vrcp.pop %v1271
    %v1273 = vmul.f32 1.0, %v1272
    %v1274 = vmul.f32 %v1266, %v1257
    %v1275 = vadd.f32 %v1118, %v1274
    %v1276 = vtanh.pop %v1275
    %v1277 = vsub.f32 1.0, %v1273
    %v1278 = vmul.f32 %v1277, %v1276
    %v1279 = vmul.f32 %v1273, %v1112
    %v1280 = vadd.f32 %v1278, %v1279
    %s1281 = scalar_lea.vmem [#allocation9], 32
    %1282 = vst [vmem:[%s1281] sm:$0xff] %v1280
    %s1283 = scalar_lea.vmem [#allocation2], 120
    %v1284 = vld [vmem:[%s1283] sm:$0xff]
    %v1285 = vld [vmem:[%s1283 + $0x8] sm:$0xff]
    %v1286 = vld [vmem:[%s1283 + $0x10] sm:$0xff]
    %1287 = vmatprep.subr.mxu0 %v426
    %1288 = vmatpush1.msra.mxu0 %v425
    %1289 = vmatprep.subr.mxu0 %v423
    %1290 = vmatpush1.msra.mxu0 %v422
    %1291 = vmatprep.subr.mxu0 %v420
    %1292 = vmatpush1.msra.mxu0 %v419
    %1293 = vmatprep.subr.mxu0 %v417
    %1294 = vmatpush1.msra.mxu0 %v416
    %1295 = vmatprep.subr.mxu0 %v414
    %1296 = vmatpush1.msra.mxu0 %v413
    %1297 = vmatprep.subr.mxu0 %v411
    %1298 = vmatpush1.msra.mxu0 %v410
    %1299 = vmatprep.subr.mxu0 %v408
    %1300 = vmatpush1.msra.mxu0 %v407
    %1301 = vmatprep.subr.mxu0 %v405
    %1302 = vmatpush1.msra.mxu0 %v404
    %1303 = vmatprep.subr.mxu0 %v402
    %1304 = vmatpush1.msra.mxu0 %v401
    %1305 = vmatprep.subr.mxu0 %v399
    %1306 = vmatpush1.msra.mxu0 %v398
    %1307 = vmatprep.subr.mxu0 %v396
    %1308 = vmatpush1.msra.mxu0 %v395
    %1309 = vmatprep.subr.mxu0 %v393
    %1310 = vmatpush1.msra.mxu0 %v392
    %1311 = vmatprep.subr.mxu0 %v390
    %1312 = vmatpush1.msra.mxu0 %v389
    %1313 = vmatprep.subr.mxu0 %v387
    %1314 = vmatpush1.msra.mxu0 %v386
    %1315 = vmatprep.subr.mxu0 %v384
    %1316 = vmatpush1.msra.mxu0 %v383
    %1317 = vmatprep.subr.mxu0 %v381
    %1318 = vmatpush1.msra.mxu0 %v380
    %1319 = vmatprep.subr.mxu0 0.0
    %1320 = vmatpush2.msra.mxu0 0.0
    %1321 = vmatprep.subr.mxu0 0.0
    %1322 = vmatpush2.msra.mxu0 0.0
    %1323 = vmatprep.subr.mxu0 0.0
    %1324 = vmatpush2.msra.mxu0 0.0
    %1325 = vmatprep.subr.mxu0 0.0
    %1326 = vmatpush2.msra.mxu0 0.0
    %1327 = vmatprep.subr.mxu0 0.0
    %1328 = vmatpush2.msra.mxu0 0.0
    %1329 = vmatprep.subr.mxu0 0.0
    %1330 = vmatpush2.msra.mxu0 0.0
    %1331 = vmatprep.subr.mxu0 0.0
    %1332 = vmatpush2.msra.mxu0 0.0
    %1333 = vmatprep.subr.mxu0 0.0
    %1334 = vmatpush2.msra.mxu0 0.0
    %1335 = vmatprep.subr.mxu0 0.0
    %1336 = vmatpush2.msra.mxu0 0.0
    %1337 = vmatprep.subr.mxu0 0.0
    %1338 = vmatpush2.msra.mxu0 0.0
    %1339 = vmatprep.subr.mxu0 0.0
    %1340 = vmatpush2.msra.mxu0 0.0
    %1341 = vmatprep.subr.mxu0 0.0
    %1342 = vmatpush2.msra.mxu0 0.0
    %1343 = vmatprep.subr.mxu0 0.0
    %1344 = vmatpush2.msra.mxu0 0.0
    %1345 = vmatprep.subr.mxu0 0.0
    %1346 = vmatpush2.msra.mxu0 0.0
    %1347 = vmatprep.subr.mxu0 0.0
    %1348 = vmatpush2.msra.mxu0 0.0
    %1349 = vmatprep.subr.mxu0 0.0
    %1350 = vmatpush2.msra.mxu0 0.0
    %1351 = vmatprep.mubr.f32.mxu0 0.0
    %1352 = vmatmul.mubr.f32.gmra.mxu0 %v1280
    %v1353 = vpop.f32.mrf.mxu0
    %v1354 = vadd.f32 %v436, %v1353
    %v1355 = vpop.f32.mrf.mxu0
    %v1356 = vadd.f32 %v440, %v1355
    %1357 = vdwg.mxu0
    %1358 = vmatprep.subr.mxu0 0.0
    %1359 = vmatpush1.msra.mxu0 %v427
    %1360 = vmatprep.subr.mxu0 0.0
    %1361 = vmatpush1.msra.mxu0 %v424
    %1362 = vmatprep.subr.mxu0 0.0
    %1363 = vmatpush1.msra.mxu0 %v421
    %1364 = vmatprep.subr.mxu0 0.0
    %1365 = vmatpush1.msra.mxu0 %v418
    %1366 = vmatprep.subr.mxu0 0.0
    %1367 = vmatpush1.msra.mxu0 %v415
    %1368 = vmatprep.subr.mxu0 0.0
    %1369 = vmatpush1.msra.mxu0 %v412
    %1370 = vmatprep.subr.mxu0 0.0
    %1371 = vmatpush1.msra.mxu0 %v409
    %1372 = vmatprep.subr.mxu0 0.0
    %1373 = vmatpush1.msra.mxu0 %v406
    %1374 = vmatprep.subr.mxu0 0.0
    %1375 = vmatpush1.msra.mxu0 %v403
    %1376 = vmatprep.subr.mxu0 0.0
    %1377 = vmatpush1.msra.mxu0 %v400
    %1378 = vmatprep.subr.mxu0 0.0
    %1379 = vmatpush1.msra.mxu0 %v397
    %1380 = vmatprep.subr.mxu0 0.0
    %1381 = vmatpush1.msra.mxu0 %v394
    %1382 = vmatprep.subr.mxu0 0.0
    %1383 = vmatpush1.msra.mxu0 %v391
    %1384 = vmatprep.subr.mxu0 0.0
    %1385 = vmatpush1.msra.mxu0 %v388
    %1386 = vmatprep.subr.mxu0 0.0
    %1387 = vmatpush1.msra.mxu0 %v385
    %1388 = vmatprep.subr.mxu0 0.0
    %1389 = vmatpush1.msra.mxu0 %v382
    %1390 = vmatprep.subr.mxu0 0.0
    %1391 = vmatpush2.msra.mxu0 0.0
    %1392 = vmatprep.subr.mxu0 0.0
    %1393 = vmatpush2.msra.mxu0 0.0
    %1394 = vmatprep.subr.mxu0 0.0
    %1395 = vmatpush2.msra.mxu0 0.0
    %1396 = vmatprep.subr.mxu0 0.0
    %1397 = vmatpush2.msra.mxu0 0.0
    %1398 = vmatprep.subr.mxu0 0.0
    %1399 = vmatpush2.msra.mxu0 0.0
    %1400 = vmatprep.subr.mxu0 0.0
    %1401 = vmatpush2.msra.mxu0 0.0
    %1402 = vmatprep.subr.mxu0 0.0
    %1403 = vmatpush2.msra.mxu0 0.0
    %1404 = vmatprep.subr.mxu0 0.0
    %1405 = vmatpush2.msra.mxu0 0.0
    %1406 = vmatprep.subr.mxu0 0.0
    %1407 = vmatpush2.msra.mxu0 0.0
    %1408 = vmatprep.subr.mxu0 0.0
    %1409 = vmatpush2.msra.mxu0 0.0
    %1410 = vmatprep.subr.mxu0 0.0
    %1411 = vmatpush2.msra.mxu0 0.0
    %1412 = vmatprep.subr.mxu0 0.0
    %1413 = vmatpush2.msra.mxu0 0.0
    %1414 = vmatprep.subr.mxu0 0.0
    %1415 = vmatpush2.msra.mxu0 0.0
    %1416 = vmatprep.subr.mxu0 0.0
    %1417 = vmatpush2.msra.mxu0 0.0
    %1418 = vmatprep.subr.mxu0 0.0
    %1419 = vmatpush2.msra.mxu0 0.0
    %1420 = vmatprep.subr.mxu0 0.0
    %1421 = vmatpush2.msra.mxu0 0.0
    %1422 = vmatprep.mubr.f32.mxu0 0.0
    %1423 = vmatmul.mubr.f32.gmra.mxu0 %v1280
    %v1424 = vpop.f32.mrf.mxu0
    %v1425 = vadd.f32 %v444, %v1424
    %v1426 = vpop.f32.mrf.mxu0
    %1427 = vdwg.mxu0
    %v1428 = vadd.f32 %v1284, %v1354
    %v1429 = vxor.u32 %v1428, 2147483648
    %v1430 = vmul.f32 %v1429, 1.442695
    %v1431 = vpow.pop %v1430
    %v1432 = vadd.f32 %v1431, 1.0
    %v1433 = vrcp.pop %v1432
    %v1434 = vmul.f32 1.0, %v1433
    %v1435 = vadd.f32 %v1285, %v1356
    %v1436 = vxor.u32 %v1435, 2147483648
    %v1437 = vmul.f32 %v1436, 1.442695
    %v1438 = vpow.pop %v1437
    %v1439 = vadd.f32 %v1438, 1.0
    %v1440 = vrcp.pop %v1439
    %v1441 = vmul.f32 1.0, %v1440
    %v1442 = vmul.f32 %v1434, %v1425
    %v1443 = vadd.f32 %v1286, %v1442
    %v1444 = vtanh.pop %v1443
    %v1445 = vsub.f32 1.0, %v1441
    %v1446 = vmul.f32 %v1445, %v1444
    %v1447 = vmul.f32 %v1441, %v1280
    %v1448 = vadd.f32 %v1446, %v1447
    %s1449 = scalar_lea.vmem [#allocation9], 40
    %1450 = vst [vmem:[%s1449] sm:$0xff] %v1448
    %s1451 = scalar_lea.vmem [#allocation2], 144
    %v1452 = vld [vmem:[%s1451] sm:$0xff]
    %v1453 = vld [vmem:[%s1451 + $0x8] sm:$0xff]
    %v1454 = vld [vmem:[%s1451 + $0x10] sm:$0xff]
    %1455 = vmatprep.subr.mxu0 %v426
    %1456 = vmatpush1.msra.mxu0 %v425
    %1457 = vmatprep.subr.mxu0 %v423
    %1458 = vmatpush1.msra.mxu0 %v422
    %1459 = vmatprep.subr.mxu0 %v420
    %1460 = vmatpush1.msra.mxu0 %v419
    %1461 = vmatprep.subr.mxu0 %v417
    %1462 = vmatpush1.msra.mxu0 %v416
    %1463 = vmatprep.subr.mxu0 %v414
    %1464 = vmatpush1.msra.mxu0 %v413
    %1465 = vmatprep.subr.mxu0 %v411
    %1466 = vmatpush1.msra.mxu0 %v410
    %1467 = vmatprep.subr.mxu0 %v408
    %1468 = vmatpush1.msra.mxu0 %v407
    %1469 = vmatprep.subr.mxu0 %v405
    %1470 = vmatpush1.msra.mxu0 %v404
    %1471 = vmatprep.subr.mxu0 %v402
    %1472 = vmatpush1.msra.mxu0 %v401
    %1473 = vmatprep.subr.mxu0 %v399
    %1474 = vmatpush1.msra.mxu0 %v398
    %1475 = vmatprep.subr.mxu0 %v396
    %1476 = vmatpush1.msra.mxu0 %v395
    %1477 = vmatprep.subr.mxu0 %v393
    %1478 = vmatpush1.msra.mxu0 %v392
    %1479 = vmatprep.subr.mxu0 %v390
    %1480 = vmatpush1.msra.mxu0 %v389
    %1481 = vmatprep.subr.mxu0 %v387
    %1482 = vmatpush1.msra.mxu0 %v386
    %1483 = vmatprep.subr.mxu0 %v384
    %1484 = vmatpush1.msra.mxu0 %v383
    %1485 = vmatprep.subr.mxu0 %v381
    %1486 = vmatpush1.msra.mxu0 %v380
    %1487 = vmatprep.subr.mxu0 0.0
    %1488 = vmatpush2.msra.mxu0 0.0
    %1489 = vmatprep.subr.mxu0 0.0
    %1490 = vmatpush2.msra.mxu0 0.0
    %1491 = vmatprep.subr.mxu0 0.0
    %1492 = vmatpush2.msra.mxu0 0.0
    %1493 = vmatprep.subr.mxu0 0.0
    %1494 = vmatpush2.msra.mxu0 0.0
    %1495 = vmatprep.subr.mxu0 0.0
    %1496 = vmatpush2.msra.mxu0 0.0
    %1497 = vmatprep.subr.mxu0 0.0
    %1498 = vmatpush2.msra.mxu0 0.0
    %1499 = vmatprep.subr.mxu0 0.0
    %1500 = vmatpush2.msra.mxu0 0.0
    %1501 = vmatprep.subr.mxu0 0.0
    %1502 = vmatpush2.msra.mxu0 0.0
    %1503 = vmatprep.subr.mxu0 0.0
    %1504 = vmatpush2.msra.mxu0 0.0
    %1505 = vmatprep.subr.mxu0 0.0
    %1506 = vmatpush2.msra.mxu0 0.0
    %1507 = vmatprep.subr.mxu0 0.0
    %1508 = vmatpush2.msra.mxu0 0.0
    %1509 = vmatprep.subr.mxu0 0.0
    %1510 = vmatpush2.msra.mxu0 0.0
    %1511 = vmatprep.subr.mxu0 0.0
    %1512 = vmatpush2.msra.mxu0 0.0
    %1513 = vmatprep.subr.mxu0 0.0
    %1514 = vmatpush2.msra.mxu0 0.0
    %1515 = vmatprep.subr.mxu0 0.0
    %1516 = vmatpush2.msra.mxu0 0.0
    %1517 = vmatprep.subr.mxu0 0.0
    %1518 = vmatpush2.msra.mxu0 0.0
    %1519 = vmatprep.mubr.f32.mxu0 0.0
    %1520 = vmatmul.mubr.f32.gmra.mxu0 %v1448
    %v1521 = vpop.f32.mrf.mxu0
    %v1522 = vadd.f32 %v436, %v1521
    %v1523 = vpop.f32.mrf.mxu0
    %v1524 = vadd.f32 %v440, %v1523
    %1525 = vdwg.mxu0
    %1526 = vmatprep.subr.mxu0 0.0
    %1527 = vmatpush1.msra.mxu0 %v427
    %1528 = vmatprep.subr.mxu0 0.0
    %1529 = vmatpush1.msra.mxu0 %v424
    %1530 = vmatprep.subr.mxu0 0.0
    %1531 = vmatpush1.msra.mxu0 %v421
    %1532 = vmatprep.subr.mxu0 0.0
    %1533 = vmatpush1.msra.mxu0 %v418
    %1534 = vmatprep.subr.mxu0 0.0
    %1535 = vmatpush1.msra.mxu0 %v415
    %1536 = vmatprep.subr.mxu0 0.0
    %1537 = vmatpush1.msra.mxu0 %v412
    %1538 = vmatprep.subr.mxu0 0.0
    %1539 = vmatpush1.msra.mxu0 %v409
    %1540 = vmatprep.subr.mxu0 0.0
    %1541 = vmatpush1.msra.mxu0 %v406
    %1542 = vmatprep.subr.mxu0 0.0
    %1543 = vmatpush1.msra.mxu0 %v403
    %1544 = vmatprep.subr.mxu0 0.0
    %1545 = vmatpush1.msra.mxu0 %v400
    %1546 = vmatprep.subr.mxu0 0.0
    %1547 = vmatpush1.msra.mxu0 %v397
    %1548 = vmatprep.subr.mxu0 0.0
    %1549 = vmatpush1.msra.mxu0 %v394
    %1550 = vmatprep.subr.mxu0 0.0
    %1551 = vmatpush1.msra.mxu0 %v391
    %1552 = vmatprep.subr.mxu0 0.0
    %1553 = vmatpush1.msra.mxu0 %v388
    %1554 = vmatprep.subr.mxu0 0.0
    %1555 = vmatpush1.msra.mxu0 %v385
    %1556 = vmatprep.subr.mxu0 0.0
    %1557 = vmatpush1.msra.mxu0 %v382
    %1558 = vmatprep.subr.mxu0 0.0
    %1559 = vmatpush2.msra.mxu0 0.0
    %1560 = vmatprep.subr.mxu0 0.0
    %1561 = vmatpush2.msra.mxu0 0.0
    %1562 = vmatprep.subr.mxu0 0.0
    %1563 = vmatpush2.msra.mxu0 0.0
    %1564 = vmatprep.subr.mxu0 0.0
    %1565 = vmatpush2.msra.mxu0 0.0
    %1566 = vmatprep.subr.mxu0 0.0
    %1567 = vmatpush2.msra.mxu0 0.0
    %1568 = vmatprep.subr.mxu0 0.0
    %1569 = vmatpush2.msra.mxu0 0.0
    %1570 = vmatprep.subr.mxu0 0.0
    %1571 = vmatpush2.msra.mxu0 0.0
    %1572 = vmatprep.subr.mxu0 0.0
    %1573 = vmatpush2.msra.mxu0 0.0
    %1574 = vmatprep.subr.mxu0 0.0
    %1575 = vmatpush2.msra.mxu0 0.0
    %1576 = vmatprep.subr.mxu0 0.0
    %1577 = vmatpush2.msra.mxu0 0.0
    %1578 = vmatprep.subr.mxu0 0.0
    %1579 = vmatpush2.msra.mxu0 0.0
    %1580 = vmatprep.subr.mxu0 0.0
    %1581 = vmatpush2.msra.mxu0 0.0
    %1582 = vmatprep.subr.mxu0 0.0
    %1583 = vmatpush2.msra.mxu0 0.0
    %1584 = vmatprep.subr.mxu0 0.0
    %1585 = vmatpush2.msra.mxu0 0.0
    %1586 = vmatprep.subr.mxu0 0.0
    %1587 = vmatpush2.msra.mxu0 0.0
    %1588 = vmatprep.subr.mxu0 0.0
    %1589 = vmatpush2.msra.mxu0 0.0
    %1590 = vmatprep.mubr.f32.mxu0 0.0
    %1591 = vmatmul.mubr.f32.gmra.mxu0 %v1448
    %v1592 = vpop.f32.mrf.mxu0
    %v1593 = vadd.f32 %v444, %v1592
    %v1594 = vpop.f32.mrf.mxu0
    %1595 = vdwg.mxu0
    %v1596 = vadd.f32 %v1452, %v1522
    %v1597 = vxor.u32 %v1596, 2147483648
    %v1598 = vmul.f32 %v1597, 1.442695
    %v1599 = vpow.pop %v1598
    %v1600 = vadd.f32 %v1599, 1.0
    %v1601 = vrcp.pop %v1600
    %v1602 = vmul.f32 1.0, %v1601
    %v1603 = vadd.f32 %v1453, %v1524
    %v1604 = vxor.u32 %v1603, 2147483648
    %v1605 = vmul.f32 %v1604, 1.442695
    %v1606 = vpow.pop %v1605
    %v1607 = vadd.f32 %v1606, 1.0
    %v1608 = vrcp.pop %v1607
    %v1609 = vmul.f32 1.0, %v1608
    %v1610 = vmul.f32 %v1602, %v1593
    %v1611 = vadd.f32 %v1454, %v1610
    %v1612 = vtanh.pop %v1611
    %v1613 = vsub.f32 1.0, %v1609
    %v1614 = vmul.f32 %v1613, %v1612
    %v1615 = vmul.f32 %v1609, %v1448
    %v1616 = vadd.f32 %v1614, %v1615
    %s1617 = scalar_lea.vmem [#allocation9], 48
    %1618 = vst [vmem:[%s1617] sm:$0xff] %v1616
    %s1619 = scalar_lea.vmem [#allocation2], 168
    %v1620 = vld [vmem:[%s1619] sm:$0xff]
    %v1621 = vld [vmem:[%s1619 + $0x8] sm:$0xff]
    %v1622 = vld [vmem:[%s1619 + $0x10] sm:$0xff]
    %1623 = vmatprep.subr.mxu0 %v426
    %1624 = vmatpush1.msra.mxu0 %v425
    %1625 = vmatprep.subr.mxu0 %v423
    %1626 = vmatpush1.msra.mxu0 %v422
    %1627 = vmatprep.subr.mxu0 %v420
    %1628 = vmatpush1.msra.mxu0 %v419
    %1629 = vmatprep.subr.mxu0 %v417
    %1630 = vmatpush1.msra.mxu0 %v416
    %1631 = vmatprep.subr.mxu0 %v414
    %1632 = vmatpush1.msra.mxu0 %v413
    %1633 = vmatprep.subr.mxu0 %v411
    %1634 = vmatpush1.msra.mxu0 %v410
    %1635 = vmatprep.subr.mxu0 %v408
    %1636 = vmatpush1.msra.mxu0 %v407
    %1637 = vmatprep.subr.mxu0 %v405
    %1638 = vmatpush1.msra.mxu0 %v404
    %1639 = vmatprep.subr.mxu0 %v402
    %1640 = vmatpush1.msra.mxu0 %v401
    %1641 = vmatprep.subr.mxu0 %v399
    %1642 = vmatpush1.msra.mxu0 %v398
    %1643 = vmatprep.subr.mxu0 %v396
    %1644 = vmatpush1.msra.mxu0 %v395
    %1645 = vmatprep.subr.mxu0 %v393
    %1646 = vmatpush1.msra.mxu0 %v392
    %1647 = vmatprep.subr.mxu0 %v390
    %1648 = vmatpush1.msra.mxu0 %v389
    %1649 = vmatprep.subr.mxu0 %v387
    %1650 = vmatpush1.msra.mxu0 %v386
    %1651 = vmatprep.subr.mxu0 %v384
    %1652 = vmatpush1.msra.mxu0 %v383
    %1653 = vmatprep.subr.mxu0 %v381
    %1654 = vmatpush1.msra.mxu0 %v380
    %1655 = vmatprep.subr.mxu0 0.0
    %1656 = vmatpush2.msra.mxu0 0.0
    %1657 = vmatprep.subr.mxu0 0.0
    %1658 = vmatpush2.msra.mxu0 0.0
    %1659 = vmatprep.subr.mxu0 0.0
    %1660 = vmatpush2.msra.mxu0 0.0
    %1661 = vmatprep.subr.mxu0 0.0
    %1662 = vmatpush2.msra.mxu0 0.0
    %1663 = vmatprep.subr.mxu0 0.0
    %1664 = vmatpush2.msra.mxu0 0.0
    %1665 = vmatprep.subr.mxu0 0.0
    %1666 = vmatpush2.msra.mxu0 0.0
    %1667 = vmatprep.subr.mxu0 0.0
    %1668 = vmatpush2.msra.mxu0 0.0
    %1669 = vmatprep.subr.mxu0 0.0
    %1670 = vmatpush2.msra.mxu0 0.0
    %1671 = vmatprep.subr.mxu0 0.0
    %1672 = vmatpush2.msra.mxu0 0.0
    %1673 = vmatprep.subr.mxu0 0.0
    %1674 = vmatpush2.msra.mxu0 0.0
    %1675 = vmatprep.subr.mxu0 0.0
    %1676 = vmatpush2.msra.mxu0 0.0
    %1677 = vmatprep.subr.mxu0 0.0
    %1678 = vmatpush2.msra.mxu0 0.0
    %1679 = vmatprep.subr.mxu0 0.0
    %1680 = vmatpush2.msra.mxu0 0.0
    %1681 = vmatprep.subr.mxu0 0.0
    %1682 = vmatpush2.msra.mxu0 0.0
    %1683 = vmatprep.subr.mxu0 0.0
    %1684 = vmatpush2.msra.mxu0 0.0
    %1685 = vmatprep.subr.mxu0 0.0
    %1686 = vmatpush2.msra.mxu0 0.0
    %1687 = vmatprep.mubr.f32.mxu0 0.0
    %1688 = vmatmul.mubr.f32.gmra.mxu0 %v1616
    %v1689 = vpop.f32.mrf.mxu0
    %v1690 = vadd.f32 %v436, %v1689
    %v1691 = vpop.f32.mrf.mxu0
    %v1692 = vadd.f32 %v440, %v1691
    %1693 = vdwg.mxu0
    %1694 = vmatprep.subr.mxu0 0.0
    %1695 = vmatpush1.msra.mxu0 %v427
    %1696 = vmatprep.subr.mxu0 0.0
    %1697 = vmatpush1.msra.mxu0 %v424
    %1698 = vmatprep.subr.mxu0 0.0
    %1699 = vmatpush1.msra.mxu0 %v421
    %1700 = vmatprep.subr.mxu0 0.0
    %1701 = vmatpush1.msra.mxu0 %v418
    %1702 = vmatprep.subr.mxu0 0.0
    %1703 = vmatpush1.msra.mxu0 %v415
    %1704 = vmatprep.subr.mxu0 0.0
    %1705 = vmatpush1.msra.mxu0 %v412
    %1706 = vmatprep.subr.mxu0 0.0
    %1707 = vmatpush1.msra.mxu0 %v409
    %1708 = vmatprep.subr.mxu0 0.0
    %1709 = vmatpush1.msra.mxu0 %v406
    %1710 = vmatprep.subr.mxu0 0.0
    %1711 = vmatpush1.msra.mxu0 %v403
    %1712 = vmatprep.subr.mxu0 0.0
    %1713 = vmatpush1.msra.mxu0 %v400
    %1714 = vmatprep.subr.mxu0 0.0
    %1715 = vmatpush1.msra.mxu0 %v397
    %1716 = vmatprep.subr.mxu0 0.0
    %1717 = vmatpush1.msra.mxu0 %v394
    %1718 = vmatprep.subr.mxu0 0.0
    %1719 = vmatpush1.msra.mxu0 %v391
    %1720 = vmatprep.subr.mxu0 0.0
    %1721 = vmatpush1.msra.mxu0 %v388
    %1722 = vmatprep.subr.mxu0 0.0
    %1723 = vmatpush1.msra.mxu0 %v385
    %1724 = vmatprep.subr.mxu0 0.0
    %1725 = vmatpush1.msra.mxu0 %v382
    %1726 = vmatprep.subr.mxu0 0.0
    %1727 = vmatpush2.msra.mxu0 0.0
    %1728 = vmatprep.subr.mxu0 0.0
    %1729 = vmatpush2.msra.mxu0 0.0
    %1730 = vmatprep.subr.mxu0 0.0
    %1731 = vmatpush2.msra.mxu0 0.0
    %1732 = vmatprep.subr.mxu0 0.0
    %1733 = vmatpush2.msra.mxu0 0.0
    %1734 = vmatprep.subr.mxu0 0.0
    %1735 = vmatpush2.msra.mxu0 0.0
    %1736 = vmatprep.subr.mxu0 0.0
    %1737 = vmatpush2.msra.mxu0 0.0
    %1738 = vmatprep.subr.mxu0 0.0
    %1739 = vmatpush2.msra.mxu0 0.0
    %1740 = vmatprep.subr.mxu0 0.0
    %1741 = vmatpush2.msra.mxu0 0.0
    %1742 = vmatprep.subr.mxu0 0.0
    %1743 = vmatpush2.msra.mxu0 0.0
    %1744 = vmatprep.subr.mxu0 0.0
    %1745 = vmatpush2.msra.mxu0 0.0
    %1746 = vmatprep.subr.mxu0 0.0
    %1747 = vmatpush2.msra.mxu0 0.0
    %1748 = vmatprep.subr.mxu0 0.0
    %1749 = vmatpush2.msra.mxu0 0.0
    %1750 = vmatprep.subr.mxu0 0.0
    %1751 = vmatpush2.msra.mxu0 0.0
    %1752 = vmatprep.subr.mxu0 0.0
    %1753 = vmatpush2.msra.mxu0 0.0
    %1754 = vmatprep.subr.mxu0 0.0
    %1755 = vmatpush2.msra.mxu0 0.0
    %1756 = vmatprep.subr.mxu0 0.0
    %1757 = vmatpush2.msra.mxu0 0.0
    %1758 = vmatprep.mubr.f32.mxu0 0.0
    %1759 = vmatmul.mubr.f32.gmra.mxu0 %v1616
    %v1760 = vpop.f32.mrf.mxu0
    %v1761 = vadd.f32 %v444, %v1760
    %v1762 = vpop.f32.mrf.mxu0
    %1763 = vdwg.mxu0
    %v1764 = vadd.f32 %v1620, %v1690
    %v1765 = vxor.u32 %v1764, 2147483648
    %v1766 = vmul.f32 %v1765, 1.442695
    %v1767 = vpow.pop %v1766
    %v1768 = vadd.f32 %v1767, 1.0
    %v1769 = vrcp.pop %v1768
    %v1770 = vmul.f32 1.0, %v1769
    %v1771 = vadd.f32 %v1621, %v1692
    %v1772 = vxor.u32 %v1771, 2147483648
    %v1773 = vmul.f32 %v1772, 1.442695
    %v1774 = vpow.pop %v1773
    %v1775 = vadd.f32 %v1774, 1.0
    %v1776 = vrcp.pop %v1775
    %v1777 = vmul.f32 1.0, %v1776
    %v1778 = vmul.f32 %v1770, %v1761
    %v1779 = vadd.f32 %v1622, %v1778
    %v1780 = vtanh.pop %v1779
    %v1781 = vsub.f32 1.0, %v1777
    %v1782 = vmul.f32 %v1781, %v1780
    %v1783 = vmul.f32 %v1777, %v1616
    %v1784 = vadd.f32 %v1782, %v1783
    %s1785 = scalar_lea.vmem [#allocation9], 56
    %1786 = vst [vmem:[%s1785] sm:$0xff] %v1784
    %1787 = vst [vmem:[#allocation10] sm:$0xff] %v1784
    // Predicated region
    $region34: #{tpu_custom_call.1} parent=1 // pred_check
      _
    $region35: #{tpu_custom_call.1} parent=1 // pred_check_branch
      %1789 = sbr.rel (0) target = $region37
    $region36: #{tpu_custom_call.1} parent=1 // pred_region
      %s1791 = ssub.s32 1024, 1024
      %1792 = vsyncadd [#allocation5], %s1791
      %s1793 = sshll.u32 [#allocation9], 4
      %s1794 = int_to_ptr.vmem [resolvable:$true] %s1793
      %1799 = dma.vmem_to_hbm [thread:$0]  %s1794, 1024, %s5, [#allocation5], 128, 128, 8
    $region37: #{tpu_custom_call.1} parent=1 // pred_fallthru
      _
    // Predicated region
    $region38: #{tpu_custom_call.1} parent=1 // pred_check
      _
    $region39: #{tpu_custom_call.1} parent=1 // pred_check_branch
      %1801 = sbr.rel (0) target = $region41
    $region40: #{tpu_custom_call.1} parent=1 // pred_region
      %s1803 = ssub.s32 128, 128
      %1804 = vsyncadd [#allocation11], %s1803
      %s1806 = sshll.u32 [#allocation10], 4
      %s1807 = int_to_ptr.vmem [resolvable:$true] %s1806
      %1809 = dma.vmem_to_hbm [thread:$0]  %s1807, 128, %s6, [#allocation11]
    $region41: #{tpu_custom_call.1} parent=1 // pred_fallthru
      _
    // Predicated region
    $region42: #{tpu_custom_call.1} parent=1 // pred_check
      _
    $region43: #{tpu_custom_call.1} parent=1 // pred_check_branch
      %1811 = sbr.rel (0) target = $region45
    $region44: #{tpu_custom_call.1} parent=1 // pred_region
      %1812 = dma.done [#allocation5], 1024
    $region45: #{tpu_custom_call.1} parent=1 // pred_fallthru
      _
    // Predicated region
    $region46: #{tpu_custom_call.1} parent=1 // pred_check
      _
    $region47: #{tpu_custom_call.1} parent=1 // pred_check_branch
      %1814 = sbr.rel (0) target = $region49
    $region48: #{tpu_custom_call.1} parent=1 // pred_region
      %1815 = dma.done [#allocation11], 128
    $region49: #{tpu_custom_call.1} parent=1 // pred_fallthru
      _
    %1816 = vsyncpa [#allocation4], 1
    %1817 = vsyncpa [#allocation7], 1
    %1818 = vsyncpa [#allocation5], 1
    %1819 = vsyncpa [#allocation11], 1

</llo_original>
